<compile_context>
chip_gen: v7x
topology: tpu7x:2x2x1
jax: 0.10.0
libtpu: 0.0.40
codegen_flags: <defaults>
</compile_context>

<pallas_src>
import functools

import jax
import jax.numpy as jnp
from jax.experimental import pallas as pl
from jax.experimental.pallas import tpu as pltpu

K = 3          # Conv1d kernel size (fixed to 3 in the module)
NB_MAX = 128   # max batch rows per grid step
NB_MIN = 16    # multiples of 16 keep bf16 (16,128) sublane tiles aligned


def _pool2(y, nb):
    """MaxPool1d(2,2) on an L-major slab y: (Lout*nb, C) -> (floor(Lout/2)*nb, C)."""
    rows, c = y.shape
    lout = rows // nb
    lp = lout // 2
    y3 = y[: 2 * lp * nb].reshape(lp, 2 * nb, c)          # aligned tile relabel
    return jnp.maximum(y3[:, :nb, :], y3[:, nb:, :]).reshape(lp * nb, c)


def tsencoder_kernel(x_ref,
                     w1_ref, s1_ref, c1_ref,
                     w2_ref, s2_ref, c2_ref,
                     w3_ref, s3_ref, c3_ref,
                     wl1_ref, s4_ref, c4_ref,
                     wl2_ref, s5_ref, c5_ref,
                     out_ref, *, nb, compute_dtype):
    cd = compute_dtype
    h = x_ref[0].astype(jnp.float32)                      # (L*nb, 1) L-major column
    length = h.shape[0] // nb

    # ---- conv1 (Cin=1): 3 shifted full-slab broadcast FMAs (VPU, f32) ----
    w1 = w1_ref[...].astype(jnp.float32)                  # (K, 1, 32)
    lo = length - K + 1
    rows = lo * nb
    acc = h[0:rows] * w1[0]                               # (rows,1)*(1,32)
    for k in range(1, K):
        acc = acc + h[k * nb: k * nb + rows] * w1[k]
    y = jnp.maximum(acc * s1_ref[...] + c1_ref[...], 0.0)  # fused BN(eval)+bias, ReLU
    h = _pool2(y, nb).astype(cd)                          # slab stored in compute dtype

    # ---- conv2 / conv3: tap-fused single MXU matmul per layer ----
    # lhs = lane-concat of the 3 row-shifted slabs -> (rows, 3*Cin); the weight
    # was pre-reshaped in glue to (3*Cin, Cout) with matching k*Cin+cin rows,
    # so each conv layer is one K=96 / K=192 MXU contraction.
    for w_ref, s_ref, c_ref in ((w2_ref, s2_ref, c2_ref),
                                (w3_ref, s3_ref, c3_ref)):
        lcur = h.shape[0] // nb
        lo = lcur - K + 1
        rows = lo * nb
        lhs = jnp.concatenate([h[k * nb: k * nb + rows] for k in range(K)],
                              axis=1)
        acc = jnp.dot(lhs, w_ref[...], preferred_element_type=jnp.float32)
        y = jnp.maximum(acc * s_ref[...] + c_ref[...], 0.0)
        h = _pool2(y, nb).astype(cd)

    # ---- linear1: one batched MXU contraction over the (Lc, 128) features ----
    # h: (Lc*nb, 128), rows ordered l*nb + n -> (Lc, nb, 128) is a pure tile
    # relabel (nb multiple of 16).  wl1 was pre-reordered in glue to
    # (Lc, 128, F1) so the PyTorch view(N, -1) feature order (c*Lc + l) is
    # matched.  Per-l partials are summed in f32 on-chip.
    cch = h.shape[1]
    lc = h.shape[0] // nb
    h3 = h.reshape(lc, nb, cch)
    zl = jax.lax.dot_general(h3, wl1_ref[...],
                             dimension_numbers=(((2,), (1,)), ((0,), (0,))),
                             preferred_element_type=jnp.float32)   # (Lc, nb, F1)
    z = jnp.sum(zl, axis=0)                                        # (nb, F1)
    z = jnp.maximum(z * s4_ref[...] + c4_ref[...], 0.0)            # linear_bn1 + ReLU

    z = jnp.dot(z.astype(cd), wl2_ref[...], preferred_element_type=jnp.float32)
    z = jnp.maximum(z * s5_ref[...] + c5_ref[...], 0.0)            # linear_bn2 + ReLU
    out_ref[...] = z.astype(out_ref.dtype)


def _vmem_budget_bytes():
    """Generation-aware VMEM request: ~110 MiB on v5e/v6e, cap-minus-headroom on v7x."""
    try:
        cap = int(pltpu.get_tpu_info().vmem_capacity_bytes)
    except Exception:
        cap = 128 * 2**20
    if cap >= 100 * 2**20:                       # v5e / v6e: 128 MiB physical
        return 110 * 2**20
    return max(32 * 2**20, cap - 12 * 2**20)     # v7x: leave compiler scratch headroom


def _choose_nb(n, length, vmem_budget):
    """Batch rows per grid step: multiple of 16, as large as batch / VMEM allow."""
    nb = max(NB_MIN, min(NB_MAX, 16 * pl.cdiv(n, 16)))
    # Rough per-step VMEM: the (L*nb, 1) f32 input column pads to ~512 B per
    # (L, sample) element (x2 buffers) + f32 conv accumulators + bf16 slabs +
    # linear1 partials -> ~1.6 KB per (L, sample) element in total.
    while nb > NB_MIN and 1600 * length * nb > vmem_budget // 2:
        nb -= 16
    # Megacore (v7x has 2 TCs sharing the "parallel" grid axis): prefer >= 2
    # grid steps when the batch is big enough to split without hurting M fill.
    if pl.cdiv(n, nb) == 1 and n >= 48:
        nb = min(nb, max(32, 16 * pl.cdiv(pl.cdiv(n, 2), 16)))
    return nb


def ts_encoder_forward(x_ncl, params, compute_dtype=jnp.bfloat16):
    """x_ncl: (N, 1, L) float32 (PyTorch layout).  Returns (N, d) float32."""
    (w1, s1, c1, w2, s2, c2, w3, s3, c3, wl1, s4, c4, wl2, s5, c5) = params
    n, _, length = x_ncl.shape
    d = wl2.shape[1]
    f1 = wl1.shape[1]
    lc = wl1.shape[0] // 128

    cd = compute_dtype
    vmem_budget = _vmem_budget_bytes()
    nb = _choose_nb(n, length, vmem_budget)
    n_pad = nb * pl.cdiv(n, nb)
    groups = n_pad // nb

    # --- glue: layout plumbing only (plain JAX / XLA, outside the kernel) ---
    x_nl = x_ncl.reshape(n, length)
    x_nl = jnp.pad(x_nl, ((0, n_pad - n), (0, 0)))
    # per batch-group L-major column: row index l*nb + j
    x_col = x_nl.reshape(groups, nb, length).transpose(0, 2, 1).reshape(
        groups, length * nb, 1)

    w1f = w1.astype(jnp.float32)                                 # (K,1,32) VPU, f32
    w2r = w2.reshape(K * w2.shape[1], w2.shape[2]).astype(cd)    # (96, 64)
    w3r = w3.reshape(K * w3.shape[1], w3.shape[2]).astype(cd)    # (192, 128)
    # wl1 rows are indexed (c*Lc + l) like PyTorch's x.view(N,-1) flatten;
    # reorder to (Lc, 128, F1) to match the kernel's batched contraction.
    wl1r = wl1.reshape(128, lc, f1).transpose(1, 0, 2).astype(cd)
    wl2c = wl2.astype(cd)

    inputs = (x_col, w1f, s1, c1, w2r, s2, c2, w3r, s3, c3,
              wl1r, s4, c4, wl2c, s5, c5)

    def _const_spec(a):
        zero = (0,) * a.ndim
        # Constant-index blocks: single-buffer to halve their VMEM reservation.
        return pl.BlockSpec(a.shape, lambda g, zero=zero: zero,
                            pipeline_mode=pl.Buffered(1))

    in_specs = [pl.BlockSpec((1, length * nb, 1), lambda g: (g, 0, 0))]
    in_specs += [_const_spec(a) for a in inputs[1:]]
    out_spec = pl.BlockSpec((nb, d), lambda g: (g, 0))

    # Advisory cost estimate for XLA's scheduler.
    lo1 = length - 2
    l1 = lo1 // 2
    lo2 = l1 - 2
    l2 = lo2 // 2
    lo3 = l2 - 2
    flops = 2 * n_pad * (lo1 * K * 1 * 32 + lo2 * K * 32 * 64 +
                         lo3 * K * 64 * 128 + lc * 128 * f1 + f1 * d)
    bytes_accessed = (n_pad * length * 4 + n_pad * d * 4 +
                      sum(int(a.size) * a.dtype.itemsize for a in inputs[1:]))
    cost = pl.CostEstimate(flops=int(flops), transcendentals=0,
                           bytes_accessed=int(bytes_accessed))

    kernel = functools.partial(tsencoder_kernel, nb=nb, compute_dtype=cd)
    out_pad = pl.pallas_call(
        kernel,
        out_shape=jax.ShapeDtypeStruct((n_pad, d), jnp.float32),
        grid=(groups,),
        in_specs=in_specs,
        out_specs=out_spec,
        compiler_params=pltpu.CompilerParams(
            dimension_semantics=("parallel",),
            vmem_limit_bytes=int(vmem_budget)),
        cost_estimate=cost,
    )(*inputs)
    return out_pad[:n]


# ----------------------------- parameter setup ------------------------------

def len_after_cnn(L):
    l = (L - 2) // 2
    l = (l - 2) // 2
    l = (l - 2) // 2
    return l


def init_params(key, L, d=32):
    lc = len_after_cnn(L)
    keys = iter(jax.random.split(key, 32))
    eps = 1e-5

    def nrm(shape, scale=0.1):
        return scale * jax.random.normal(next(keys), shape, jnp.float32)

    def bn(c):
        gamma = 1.0 + nrm((c,))
        beta = nrm((c,))
        mean = nrm((c,))
        var = 0.5 + jnp.abs(nrm((c,), 1.0))
        scale = gamma / jnp.sqrt(var + eps)
        return scale, mean, beta

    def conv_layer(k, cin, cout):
        w = nrm((k, cin, cout))          # torch layout is (cout, cin, k); transposed here
        b = nrm((cout,))
        scale, mean, beta = bn(cout)
        s = scale.reshape(1, cout)
        c = ((b - mean) * scale + beta).reshape(1, cout)
        return w, s, c

    def linear_layer(fin, fout):
        w = nrm((fin, fout), 0.05)       # torch weight.T
        b = nrm((fout,))
        scale, mean, beta = bn(fout)
        s = scale.reshape(1, fout)
        c = ((b - mean) * scale + beta).reshape(1, fout)
        return w, s, c

    w1, s1, c1 = conv_layer(K, 1, 32)
    w2, s2, c2 = conv_layer(K, 32, 64)
    w3, s3, c3 = conv_layer(K, 64, 128)
    wl1, s4, c4 = linear_layer(128 * lc, 512)
    wl2, s5, c5 = linear_layer(512, d)
    return (w1, s1, c1, w2, s2, c2, w3, s3, c3, wl1, s4, c4, wl2, s5, c5)


# ------------------------------ pure-JAX reference --------------------------

def ref_forward(x_ncl, params):
    (w1, s1, c1, w2, s2, c2, w3, s3, c3, wl1, s4, c4, wl2, s5, c5) = params

    def block(h, w, s, c):
        w_oik = jnp.transpose(w, (2, 1, 0))                  # (Cout, Cin, K)
        y = jax.lax.conv_general_dilated(
            h, w_oik, window_strides=(1,), padding='VALID',
            dimension_numbers=('NCH', 'OIH', 'NCH'))
        y = y * s.reshape(1, -1, 1) + c.reshape(1, -1, 1)
        y = jnp.maximum(y, 0.0)
        lp = y.shape[-1] // 2
        return y[..., :2 * lp].reshape(y.shape[0], y.shape[1], lp, 2).max(-1)

    h = block(x_ncl, w1, s1, c1)
    h = block(h, w2, s2, c2)
    h = block(h, w3, s3, c3)
    hf = h.reshape(h.shape[0], -1)                           # PyTorch view(N, -1)
    z = jnp.maximum(hf @ wl1 * s4 + c4, 0.0)
    z = jnp.maximum(z @ wl2 * s5 + c5, 0.0)
    return z


if __name__ == "__main__":
    N, L, D = 2, 32, 32                                      # L=32 -> data_len_after_cnn=2
    key = jax.random.PRNGKey(0)
    kx, kp = jax.random.split(key)
    x = jax.random.normal(kx, (N, 1, L), jnp.float32)        # PyTorch NCL input
    params = init_params(kp, L, D)

    ref = ref_forward(x, params)

    # f32 path: tight correctness check against the pure-JAX reference.
    out_f32 = jax.block_until_ready(ts_encoder_forward(x, params, jnp.float32))
    assert out_f32.shape == (N, D), out_f32.shape
    err32 = float(jnp.max(jnp.abs(out_f32 - ref)))
    assert jnp.allclose(out_f32, ref, atol=2e-4, rtol=2e-4), f"f32 max abs err {err32}"

    # bf16-matmul path (default / perf config): loose check (f32 accumulation).
    out_bf16 = jax.block_until_ready(ts_encoder_forward(x, params, jnp.bfloat16))
    assert out_bf16.shape == (N, D), out_bf16.shape
    errbf = float(jnp.max(jnp.abs(out_bf16 - ref)))
    assert jnp.allclose(out_bf16, ref, atol=1e-1, rtol=1e-1), f"bf16 max abs err {errbf}"

    print("KERNEL_OK")
</pallas_src>

<mosaic_0001>
module attributes {stable_mosaic.version = 11 : i64} {
  func.func @tsencoder_kernel(%arg0: i32, %arg1: memref<1x512x1xf32, #tpu.memory_space<vmem>>, %arg2: memref<3x1x32xf32, #tpu.memory_space<vmem>>, %arg3: memref<1x32xf32, #tpu.memory_space<vmem>>, %arg4: memref<1x32xf32, #tpu.memory_space<vmem>>, %arg5: memref<96x64xf32, #tpu.memory_space<vmem>>, %arg6: memref<1x64xf32, #tpu.memory_space<vmem>>, %arg7: memref<1x64xf32, #tpu.memory_space<vmem>>, %arg8: memref<192x128xf32, #tpu.memory_space<vmem>>, %arg9: memref<1x128xf32, #tpu.memory_space<vmem>>, %arg10: memref<1x128xf32, #tpu.memory_space<vmem>>, %arg11: memref<2x128x512xf32, #tpu.memory_space<vmem>>, %arg12: memref<1x512xf32, #tpu.memory_space<vmem>>, %arg13: memref<1x512xf32, #tpu.memory_space<vmem>>, %arg14: memref<512x32xf32, #tpu.memory_space<vmem>>, %arg15: memref<1x32xf32, #tpu.memory_space<vmem>>, %arg16: memref<1x32xf32, #tpu.memory_space<vmem>>, %arg17: memref<16x32xf32, #tpu.memory_space<vmem>>) attributes {dimension_semantics = [#tpu.dimension_semantics<parallel>], iteration_bounds = array<i64: 1>, scalar_prefetch = 0 : i64, scratch_operands = 0 : i64, tpu.core_type = #tpu.core_type<tc>, window_params = [{transform_indices = @transform_0, window_bounds = array<i64: 1, 512, 1>}, {pipeline_mode = #tpu.pipeline_mode<synchronous>, transform_indices = @transform_1, window_bounds = array<i64: 3, 1, 32>}, {pipeline_mode = #tpu.pipeline_mode<synchronous>, transform_indices = @transform_2, window_bounds = array<i64: 1, 32>}, {pipeline_mode = #tpu.pipeline_mode<synchronous>, transform_indices = @transform_3, window_bounds = array<i64: 1, 32>}, {pipeline_mode = #tpu.pipeline_mode<synchronous>, transform_indices = @transform_4, window_bounds = array<i64: 96, 64>}, {pipeline_mode = #tpu.pipeline_mode<synchronous>, transform_indices = @transform_5, window_bounds = array<i64: 1, 64>}, {pipeline_mode = #tpu.pipeline_mode<synchronous>, transform_indices = @transform_6, window_bounds = array<i64: 1, 64>}, {pipeline_mode = #tpu.pipeline_mode<synchronous>, transform_indices = @transform_7, window_bounds = array<i64: 192, 128>}, {pipeline_mode = #tpu.pipeline_mode<synchronous>, transform_indices = @transform_8, window_bounds = array<i64: 1, 128>}, {pipeline_mode = #tpu.pipeline_mode<synchronous>, transform_indices = @transform_9, window_bounds = array<i64: 1, 128>}, {pipeline_mode = #tpu.pipeline_mode<synchronous>, transform_indices = @transform_10, window_bounds = array<i64: 2, 128, 512>}, {pipeline_mode = #tpu.pipeline_mode<synchronous>, transform_indices = @transform_11, window_bounds = array<i64: 1, 512>}, {pipeline_mode = #tpu.pipeline_mode<synchronous>, transform_indices = @transform_12, window_bounds = array<i64: 1, 512>}, {pipeline_mode = #tpu.pipeline_mode<synchronous>, transform_indices = @transform_13, window_bounds = array<i64: 512, 32>}, {pipeline_mode = #tpu.pipeline_mode<synchronous>, transform_indices = @transform_14, window_bounds = array<i64: 1, 32>}, {pipeline_mode = #tpu.pipeline_mode<synchronous>, transform_indices = @transform_15, window_bounds = array<i64: 1, 32>}, {transform_indices = @transform_16, window_bounds = array<i64: 16, 32>}]} {
    %c0 = arith.constant 0 : index
    %c0_0 = arith.constant 0 : index
    %c0_1 = arith.constant 0 : index
    %0 = vector.load %arg1[%c0, %c0_0, %c0_1] : memref<1x512x1xf32, #tpu.memory_space<vmem>>, vector<1x512x1xf32>
    %1 = vector.shape_cast %0 : vector<1x512x1xf32> to vector<512x1xf32>
    %c0_2 = arith.constant 0 : index
    %c0_3 = arith.constant 0 : index
    %c0_4 = arith.constant 0 : index
    %2 = vector.load %arg2[%c0_2, %c0_3, %c0_4] : memref<3x1x32xf32, #tpu.memory_space<vmem>>, vector<3x1x32xf32>
    %3 = vector.extract_strided_slice %1 {offsets = [0, 0], sizes = [480, 1], strides = [1, 1]} : vector<512x1xf32> to vector<480x1xf32>
    %4 = vector.extract_strided_slice %2 {offsets = [0, 0, 0], sizes = [1, 1, 32], strides = [1, 1, 1]} : vector<3x1x32xf32> to vector<1x1x32xf32>
    %5 = vector.shape_cast %4 : vector<1x1x32xf32> to vector<1x32xf32>
    %6 = vector.broadcast %3 : vector<480x1xf32> to vector<480x32xf32>
    %7 = vector.broadcast %5 : vector<1x32xf32> to vector<480x32xf32>
    %8 = arith.mulf %6, %7 : vector<480x32xf32>
    %9 = vector.extract_strided_slice %1 {offsets = [16, 0], sizes = [480, 1], strides = [1, 1]} : vector<512x1xf32> to vector<480x1xf32>
    %10 = vector.extract_strided_slice %2 {offsets = [1, 0, 0], sizes = [1, 1, 32], strides = [1, 1, 1]} : vector<3x1x32xf32> to vector<1x1x32xf32>
    %11 = vector.shape_cast %10 : vector<1x1x32xf32> to vector<1x32xf32>
    %12 = vector.broadcast %9 : vector<480x1xf32> to vector<480x32xf32>
    %13 = vector.broadcast %11 : vector<1x32xf32> to vector<480x32xf32>
    %14 = arith.mulf %12, %13 : vector<480x32xf32>
    %15 = arith.addf %8, %14 : vector<480x32xf32>
    %16 = vector.extract_strided_slice %1 {offsets = [32, 0], sizes = [480, 1], strides = [1, 1]} : vector<512x1xf32> to vector<480x1xf32>
    %17 = vector.extract_strided_slice %2 {offsets = [2, 0, 0], sizes = [1, 1, 32], strides = [1, 1, 1]} : vector<3x1x32xf32> to vector<1x1x32xf32>
    %18 = vector.shape_cast %17 : vector<1x1x32xf32> to vector<1x32xf32>
    %19 = vector.broadcast %16 : vector<480x1xf32> to vector<480x32xf32>
    %20 = vector.broadcast %18 : vector<1x32xf32> to vector<480x32xf32>
    %21 = arith.mulf %19, %20 : vector<480x32xf32>
    %22 = arith.addf %15, %21 : vector<480x32xf32>
    %c0_5 = arith.constant 0 : index
    %c0_6 = arith.constant 0 : index
    %23 = vector.load %arg3[%c0_5, %c0_6] : memref<1x32xf32, #tpu.memory_space<vmem>>, vector<1x32xf32>
    %24 = vector.broadcast %23 : vector<1x32xf32> to vector<480x32xf32>
    %25 = arith.mulf %22, %24 : vector<480x32xf32>
    %c0_7 = arith.constant 0 : index
    %c0_8 = arith.constant 0 : index
    %26 = vector.load %arg4[%c0_7, %c0_8] : memref<1x32xf32, #tpu.memory_space<vmem>>, vector<1x32xf32>
    %27 = vector.broadcast %26 : vector<1x32xf32> to vector<480x32xf32>
    %28 = arith.addf %25, %27 : vector<480x32xf32>
    %cst = arith.constant 0.000000e+00 : f32
    %29 = vector.broadcast %cst : f32 to vector<480x32xf32>
    %30 = arith.maximumf %28, %29 : vector<480x32xf32>
    %31 = vector.shape_cast %30 : vector<480x32xf32> to vector<15x32x32xf32>
    %32 = vector.extract_strided_slice %31 {offsets = [0, 0, 0], sizes = [15, 16, 32], strides = [1, 1, 1]} : vector<15x32x32xf32> to vector<15x16x32xf32>
    %33 = vector.extract_strided_slice %31 {offsets = [0, 16, 0], sizes = [15, 16, 32], strides = [1, 1, 1]} : vector<15x32x32xf32> to vector<15x16x32xf32>
    %34 = arith.maximumf %32, %33 : vector<15x16x32xf32>
    %35 = vector.shape_cast %34 : vector<15x16x32xf32> to vector<240x32xf32>
    %36 = vector.extract_strided_slice %35 {offsets = [0, 0], sizes = [208, 32], strides = [1, 1]} : vector<240x32xf32> to vector<208x32xf32>
    %37 = vector.extract_strided_slice %35 {offsets = [16, 0], sizes = [208, 32], strides = [1, 1]} : vector<240x32xf32> to vector<208x32xf32>
    %38 = vector.extract_strided_slice %35 {offsets = [32, 0], sizes = [208, 32], strides = [1, 1]} : vector<240x32xf32> to vector<208x32xf32>
    %39 = tpu.concatenate %36, %37, %38 in 1 : vector<208x32xf32>, vector<208x32xf32>, vector<208x32xf32> -> vector<208x96xf32>
    %c0_9 = arith.constant 0 : index
    %c0_10 = arith.constant 0 : index
    %40 = vector.load %arg5[%c0_9, %c0_10] : memref<96x64xf32, #tpu.memory_space<vmem>>, vector<96x64xf32>
    %cst_11 = arith.constant dense<0.000000e+00> : vector<208x64xf32>
    %41 = tpu.matmul %39, %40, %cst_11 {dimension_numbers = #tpu.dot_dimension_numbers<[1], [0], [0], [1], [0, 0, 1, 1], [], []>} : vector<208x96xf32>, vector<96x64xf32>, vector<208x64xf32> -> vector<208x64xf32>
    %c0_12 = arith.constant 0 : index
    %c0_13 = arith.constant 0 : index
    %42 = vector.load %arg6[%c0_12, %c0_13] : memref<1x64xf32, #tpu.memory_space<vmem>>, vector<1x64xf32>
    %43 = vector.broadcast %42 : vector<1x64xf32> to vector<208x64xf32>
    %44 = arith.mulf %41, %43 : vector<208x64xf32>
    %c0_14 = arith.constant 0 : index
    %c0_15 = arith.constant 0 : index
    %45 = vector.load %arg7[%c0_14, %c0_15] : memref<1x64xf32, #tpu.memory_space<vmem>>, vector<1x64xf32>
    %46 = vector.broadcast %45 : vector<1x64xf32> to vector<208x64xf32>
    %47 = arith.addf %44, %46 : vector<208x64xf32>
    %cst_16 = arith.constant 0.000000e+00 : f32
    %48 = vector.broadcast %cst_16 : f32 to vector<208x64xf32>
    %49 = arith.maximumf %47, %48 : vector<208x64xf32>
    %50 = vector.extract_strided_slice %49 {offsets = [0, 0], sizes = [192, 64], strides = [1, 1]} : vector<208x64xf32> to vector<192x64xf32>
    %51 = vector.shape_cast %50 : vector<192x64xf32> to vector<6x32x64xf32>
    %52 = vector.extract_strided_slice %51 {offsets = [0, 0, 0], sizes = [6, 16, 64], strides = [1, 1, 1]} : vector<6x32x64xf32> to vector<6x16x64xf32>
    %53 = vector.extract_strided_slice %51 {offsets = [0, 16, 0], sizes = [6, 16, 64], strides = [1, 1, 1]} : vector<6x32x64xf32> to vector<6x16x64xf32>
    %54 = arith.maximumf %52, %53 : vector<6x16x64xf32>
    %55 = vector.shape_cast %54 : vector<6x16x64xf32> to vector<96x64xf32>
    %56 = vector.extract_strided_slice %55 {offsets = [0, 0], sizes = [64, 64], strides = [1, 1]} : vector<96x64xf32> to vector<64x64xf32>
    %57 = vector.extract_strided_slice %55 {offsets = [16, 0], sizes = [64, 64], strides = [1, 1]} : vector<96x64xf32> to vector<64x64xf32>
    %58 = vector.extract_strided_slice %55 {offsets = [32, 0], sizes = [64, 64], strides = [1, 1]} : vector<96x64xf32> to vector<64x64xf32>
    %59 = tpu.concatenate %56, %57, %58 in 1 : vector<64x64xf32>, vector<64x64xf32>, vector<64x64xf32> -> vector<64x192xf32>
    %c0_17 = arith.constant 0 : index
    %c0_18 = arith.constant 0 : index
    %60 = vector.load %arg8[%c0_17, %c0_18] : memref<192x128xf32, #tpu.memory_space<vmem>>, vector<192x128xf32>
    %cst_19 = arith.constant dense<0.000000e+00> : vector<64x128xf32>
    %61 = tpu.matmul %59, %60, %cst_19 {dimension_numbers = #tpu.dot_dimension_numbers<[1], [0], [0], [1], [0, 0, 1, 1], [], []>} : vector<64x192xf32>, vector<192x128xf32>, vector<64x128xf32> -> vector<64x128xf32>
    %c0_20 = arith.constant 0 : index
    %c0_21 = arith.constant 0 : index
    %62 = vector.load %arg9[%c0_20, %c0_21] : memref<1x128xf32, #tpu.memory_space<vmem>>, vector<1x128xf32>
    %63 = vector.broadcast %62 : vector<1x128xf32> to vector<64x128xf32>
    %64 = arith.mulf %61, %63 : vector<64x128xf32>
    %c0_22 = arith.constant 0 : index
    %c0_23 = arith.constant 0 : index
    %65 = vector.load %arg10[%c0_22, %c0_23] : memref<1x128xf32, #tpu.memory_space<vmem>>, vector<1x128xf32>
    %66 = vector.broadcast %65 : vector<1x128xf32> to vector<64x128xf32>
    %67 = arith.addf %64, %66 : vector<64x128xf32>
    %cst_24 = arith.constant 0.000000e+00 : f32
    %68 = vector.broadcast %cst_24 : f32 to vector<64x128xf32>
    %69 = arith.maximumf %67, %68 : vector<64x128xf32>
    %70 = vector.shape_cast %69 : vector<64x128xf32> to vector<2x32x128xf32>
    %71 = vector.extract_strided_slice %70 {offsets = [0, 0, 0], sizes = [2, 16, 128], strides = [1, 1, 1]} : vector<2x32x128xf32> to vector<2x16x128xf32>
    %72 = vector.extract_strided_slice %70 {offsets = [0, 16, 0], sizes = [2, 16, 128], strides = [1, 1, 1]} : vector<2x32x128xf32> to vector<2x16x128xf32>
    %73 = arith.maximumf %71, %72 : vector<2x16x128xf32>
    %74 = vector.shape_cast %73 : vector<2x16x128xf32> to vector<32x128xf32>
    %75 = vector.shape_cast %74 : vector<32x128xf32> to vector<2x16x128xf32>
    %c0_25 = arith.constant 0 : index
    %c0_26 = arith.constant 0 : index
    %c0_27 = arith.constant 0 : index
    %76 = vector.load %arg11[%c0_25, %c0_26, %c0_27] : memref<2x128x512xf32, #tpu.memory_space<vmem>>, vector<2x128x512xf32>
    %cst_28 = arith.constant dense<0.000000e+00> : vector<2x16x512xf32>
    %77 = tpu.matmul %75, %76, %cst_28 {dimension_numbers = #tpu.dot_dimension_numbers<[2], [1], [1], [2], [0, 0, 0, 1, 1, 2], [0], [0]>} : vector<2x16x128xf32>, vector<2x128x512xf32>, vector<2x16x512xf32> -> vector<2x16x512xf32>
    %cst_29 = arith.constant dense<0.000000e+00> : vector<16x512xf32>
    %78 = vector.multi_reduction <add>, %77, %cst_29 [0] : vector<2x16x512xf32> to vector<16x512xf32>
    %c0_30 = arith.constant 0 : index
    %c0_31 = arith.constant 0 : index
    %79 = vector.load %arg12[%c0_30, %c0_31] : memref<1x512xf32, #tpu.memory_space<vmem>>, vector<1x512xf32>
    %80 = vector.broadcast %79 : vector<1x512xf32> to vector<16x512xf32>
    %81 = arith.mulf %78, %80 : vector<16x512xf32>
    %c0_32 = arith.constant 0 : index
    %c0_33 = arith.constant 0 : index
    %82 = vector.load %arg13[%c0_32, %c0_33] : memref<1x512xf32, #tpu.memory_space<vmem>>, vector<1x512xf32>
    %83 = vector.broadcast %82 : vector<1x512xf32> to vector<16x512xf32>
    %84 = arith.addf %81, %83 : vector<16x512xf32>
    %cst_34 = arith.constant 0.000000e+00 : f32
    %85 = vector.broadcast %cst_34 : f32 to vector<16x512xf32>
    %86 = arith.maximumf %84, %85 : vector<16x512xf32>
    %c0_35 = arith.constant 0 : index
    %c0_36 = arith.constant 0 : index
    %87 = vector.load %arg14[%c0_35, %c0_36] : memref<512x32xf32, #tpu.memory_space<vmem>>, vector<512x32xf32>
    %cst_37 = arith.constant dense<0.000000e+00> : vector<16x32xf32>
    %88 = tpu.matmul %86, %87, %cst_37 {dimension_numbers = #tpu.dot_dimension_numbers<[1], [0], [0], [1], [0, 0, 1, 1], [], []>} : vector<16x512xf32>, vector<512x32xf32>, vector<16x32xf32> -> vector<16x32xf32>
    %c0_38 = arith.constant 0 : index
    %c0_39 = arith.constant 0 : index
    %89 = vector.load %arg15[%c0_38, %c0_39] : memref<1x32xf32, #tpu.memory_space<vmem>>, vector<1x32xf32>
    %90 = vector.broadcast %89 : vector<1x32xf32> to vector<16x32xf32>
    %91 = arith.mulf %88, %90 : vector<16x32xf32>
    %c0_40 = arith.constant 0 : index
    %c0_41 = arith.constant 0 : index
    %92 = vector.load %arg16[%c0_40, %c0_41] : memref<1x32xf32, #tpu.memory_space<vmem>>, vector<1x32xf32>
    %93 = vector.broadcast %92 : vector<1x32xf32> to vector<16x32xf32>
    %94 = arith.addf %91, %93 : vector<16x32xf32>
    %cst_42 = arith.constant 0.000000e+00 : f32
    %95 = vector.broadcast %cst_42 : f32 to vector<16x32xf32>
    %96 = arith.maximumf %94, %95 : vector<16x32xf32>
    %c0_43 = arith.constant 0 : index
    %c0_44 = arith.constant 0 : index
    %97 = vector.load %arg17[%c0_43, %c0_44] : memref<16x32xf32, #tpu.memory_space<vmem>>, vector<16x32xf32>
    tpu.vector_store %arg17[%c0_43, %c0_44], %96 {strides = array<i32>} : memref<16x32xf32, #tpu.memory_space<vmem>>, vector<16x32xf32>,
    return
  }
  func.func @transform_0(%arg0: i32) -> (i32, i32, i32) {
    %c0_i32 = arith.constant 0 : i32
    %c0_i32_0 = arith.constant 0 : i32
    %c0_i32_1 = arith.constant 0 : i32
    return %arg0, %c0_i32, %c0_i32_0 : i32, i32, i32
  }
  func.func @transform_1(%arg0: i32) -> (i32, i32, i32) {
    %c0_i32 = arith.constant 0 : i32
    %c0_i32_0 = arith.constant 0 : i32
    %c0_i32_1 = arith.constant 0 : i32
    %c0_i32_2 = arith.constant 0 : i32
    return %c0_i32, %c0_i32_0, %c0_i32_1 : i32, i32, i32
  }
  func.func @transform_2(%arg0: i32) -> (i32, i32) {
    %c0_i32 = arith.constant 0 : i32
    %c0_i32_0 = arith.constant 0 : i32
    %c0_i32_1 = arith.constant 0 : i32
    return %c0_i32, %c0_i32_0 : i32, i32
  }
  func.func @transform_3(%arg0: i32) -> (i32, i32) {
    %c0_i32 = arith.constant 0 : i32
    %c0_i32_0 = arith.constant 0 : i32
    %c0_i32_1 = arith.constant 0 : i32
    return %c0_i32, %c0_i32_0 : i32, i32
  }
  func.func @transform_4(%arg0: i32) -> (i32, i32) {
    %c0_i32 = arith.constant 0 : i32
    %c0_i32_0 = arith.constant 0 : i32
    %c0_i32_1 = arith.constant 0 : i32
    return %c0_i32, %c0_i32_0 : i32, i32
  }
  func.func @transform_5(%arg0: i32) -> (i32, i32) {
    %c0_i32 = arith.constant 0 : i32
    %c0_i32_0 = arith.constant 0 : i32
    %c0_i32_1 = arith.constant 0 : i32
    return %c0_i32, %c0_i32_0 : i32, i32
  }
  func.func @transform_6(%arg0: i32) -> (i32, i32) {
    %c0_i32 = arith.constant 0 : i32
    %c0_i32_0 = arith.constant 0 : i32
    %c0_i32_1 = arith.constant 0 : i32
    return %c0_i32, %c0_i32_0 : i32, i32
  }
  func.func @transform_7(%arg0: i32) -> (i32, i32) {
    %c0_i32 = arith.constant 0 : i32
    %c0_i32_0 = arith.constant 0 : i32
    %c0_i32_1 = arith.constant 0 : i32
    return %c0_i32, %c0_i32_0 : i32, i32
  }
  func.func @transform_8(%arg0: i32) -> (i32, i32) {
    %c0_i32 = arith.constant 0 : i32
    %c0_i32_0 = arith.constant 0 : i32
    %c0_i32_1 = arith.constant 0 : i32
    return %c0_i32, %c0_i32_0 : i32, i32
  }
  func.func @transform_9(%arg0: i32) -> (i32, i32) {
    %c0_i32 = arith.constant 0 : i32
    %c0_i32_0 = arith.constant 0 : i32
    %c0_i32_1 = arith.constant 0 : i32
    return %c0_i32, %c0_i32_0 : i32, i32
  }
  func.func @transform_10(%arg0: i32) -> (i32, i32, i32) {
    %c0_i32 = arith.constant 0 : i32
    %c0_i32_0 = arith.constant 0 : i32
    %c0_i32_1 = arith.constant 0 : i32
    %c0_i32_2 = arith.constant 0 : i32
    return %c0_i32, %c0_i32_0, %c0_i32_1 : i32, i32, i32
  }
  func.func @transform_11(%arg0: i32) -> (i32, i32) {
    %c0_i32 = arith.constant 0 : i32
    %c0_i32_0 = arith.constant 0 : i32
    %c0_i32_1 = arith.constant 0 : i32
    return %c0_i32, %c0_i32_0 : i32, i32
  }
  func.func @transform_12(%arg0: i32) -> (i32, i32) {
    %c0_i32 = arith.constant 0 : i32
    %c0_i32_0 = arith.constant 0 : i32
    %c0_i32_1 = arith.constant 0 : i32
    return %c0_i32, %c0_i32_0 : i32, i32
  }
  func.func @transform_13(%arg0: i32) -> (i32, i32) {
    %c0_i32 = arith.constant 0 : i32
    %c0_i32_0 = arith.constant 0 : i32
    %c0_i32_1 = arith.constant 0 : i32
    return %c0_i32, %c0_i32_0 : i32, i32
  }
  func.func @transform_14(%arg0: i32) -> (i32, i32) {
    %c0_i32 = arith.constant 0 : i32
    %c0_i32_0 = arith.constant 0 : i32
    %c0_i32_1 = arith.constant 0 : i32
    return %c0_i32, %c0_i32_0 : i32, i32
  }
  func.func @transform_15(%arg0: i32) -> (i32, i32) {
    %c0_i32 = arith.constant 0 : i32
    %c0_i32_0 = arith.constant 0 : i32
    %c0_i32_1 = arith.constant 0 : i32
    return %c0_i32, %c0_i32_0 : i32, i32
  }
  func.func @transform_16(%arg0: i32) -> (i32, i32) {
    %c0_i32 = arith.constant 0 : i32
    %c0_i32_0 = arith.constant 0 : i32
    return %arg0, %c0_i32 : i32, i32
  }
}

</mosaic_0001>

<llo_original>
// kernel: tpu_custom_call.1
$region0: #{tpu_custom_call.1}
  #allocation0 [shape = 'u32[]', space=smem, size = 0x4, offset = 0x4, fixed_abs, tag = 'smem constant byte address 0x4 - core index']
  #allocation1 [shape = 'u32[144,128]{1,0:T(1,128)}', space=vmem, size = 0x12000, scoped, tag = 'internal scratch']
  %s0 = inlined_call_operand.hbm [shape: f32[1,512,1], index: 0, kind: input, shape index: {}]
  %s1 = inlined_call_operand.hbm [shape: f32[3,1,32], index: 1, kind: input, shape index: {}]
  %s2 = inlined_call_operand.hbm [shape: f32[1,32], index: 2, kind: input, shape index: {}]
  %s3 = inlined_call_operand.hbm [shape: f32[1,32], index: 3, kind: input, shape index: {}]
  %s4 = inlined_call_operand.hbm [shape: f32[96,64], index: 4, kind: input, shape index: {}]
  %s5 = inlined_call_operand.hbm [shape: f32[1,64], index: 5, kind: input, shape index: {}]
  %s6 = inlined_call_operand.hbm [shape: f32[1,64], index: 6, kind: input, shape index: {}]
  %s7 = inlined_call_operand.hbm [shape: f32[192,128], index: 7, kind: input, shape index: {}]
  %s8 = inlined_call_operand.hbm [shape: f32[1,128], index: 8, kind: input, shape index: {}]
  %s9 = inlined_call_operand.hbm [shape: f32[1,128], index: 9, kind: input, shape index: {}]
  %s10 = inlined_call_operand.hbm [shape: f32[2,128,512], index: 10, kind: input, shape index: {}]
  %s11 = inlined_call_operand.hbm [shape: f32[1,512], index: 11, kind: input, shape index: {}]
  %s12 = inlined_call_operand.hbm [shape: f32[1,512], index: 12, kind: input, shape index: {}]
  %s13 = inlined_call_operand.hbm [shape: f32[512,32], index: 13, kind: input, shape index: {}]
  %s14 = inlined_call_operand.hbm [shape: f32[1,32], index: 14, kind: input, shape index: {}]
  %s15 = inlined_call_operand.hbm [shape: f32[1,32], index: 15, kind: input, shape index: {}]
  %s16 = inlined_call_operand.hbm [shape: f32[16,32], index: 16, kind: output, shape index: {}]
  %s17 = sld [smem:[#allocation0]]
  $region138: #{tpu_custom_call.1} parent=0
    _
  %s19 = ssub.s32 1, %s17
  %s20 = scalar_select 0, %s19, %s17
  $region1: #{tpu_custom_call.1} parent=0
    #allocation2 [shape = 'u8[262144]{0}', space=vmem, size = 0x40000, scoped, tag = 'input window, operand 0, single buffered']
    #allocation3 [shape = 's32[1]{0}', space=sflag, size = 0x4, scoped, tag = 'scoped memory for tpu_custom_call.1']
    #allocation4 [shape = 's32[1]{0}', space=sflag, size = 0x4, scoped, tag = 'scoped memory for tpu_custom_call.1']
    #allocation5 [shape = 'u8[1536]{0}', space=vmem, size = 0x800, scoped, tag = 'input window, operand 1, single buffered']
    #allocation6 [shape = 's32[1]{0}', space=sflag, size = 0x4, scoped, tag = 'scoped memory for tpu_custom_call.1']
    #allocation7 [shape = 'u8[512]{0}', space=vmem, size = 0x400, scoped, tag = 'input window, operand 2, single buffered']
    #allocation8 [shape = 'u8[512]{0}', space=vmem, size = 0x400, scoped, tag = 'input window, operand 3, single buffered']
    #allocation9 [shape = 's32[1]{0}', space=sflag, size = 0x4, scoped, tag = 'scoped memory for tpu_custom_call.1']
    #allocation10 [shape = 'u8[49152]{0}', space=vmem, size = 0xc000, scoped, tag = 'input window, operand 4, single buffered']
    #allocation11 [shape = 'u8[512]{0}', space=vmem, size = 0x400, scoped, tag = 'input window, operand 5, single buffered']
    #allocation12 [shape = 's32[1]{0}', space=sflag, size = 0x4, scoped, tag = 'scoped memory for tpu_custom_call.1']
    #allocation13 [shape = 'u8[512]{0}', space=vmem, size = 0x400, scoped, tag = 'input window, operand 6, single buffered']
    #allocation14 [shape = 'u8[98304]{0}', space=vmem, size = 0x18000, scoped, tag = 'input window, operand 7, single buffered']
    #allocation15 [shape = 's32[1]{0}', space=sflag, size = 0x4, scoped, tag = 'scoped memory for tpu_custom_call.1']
    #allocation16 [shape = 'u8[512]{0}', space=vmem, size = 0x400, scoped, tag = 'input window, operand 8, single buffered']
    #allocation17 [shape = 'u8[512]{0}', space=vmem, size = 0x400, scoped, tag = 'input window, operand 9, single buffered']
    #allocation18 [shape = 's32[1]{0}', space=sflag, size = 0x4, scoped, tag = 'scoped memory for tpu_custom_call.1']
    #allocation19 [shape = 'u8[524288]{0}', space=vmem, size = 0x80000, scoped, tag = 'input window, operand 10, single buffered']
    #allocation20 [shape = 'u8[2048]{0}', space=vmem, size = 0x800, scoped, tag = 'input window, operand 11, single buffered']
    #allocation21 [shape = 's32[1]{0}', space=sflag, size = 0x4, scoped, tag = 'scoped memory for tpu_custom_call.1']
    #allocation22 [shape = 'u8[2048]{0}', space=vmem, size = 0x800, scoped, tag = 'input window, operand 12, single buffered']
    #allocation23 [shape = 'u8[262144]{0}', space=vmem, size = 0x40000, scoped, tag = 'input window, operand 13, single buffered']
    #allocation24 [shape = 's32[1]{0}', space=sflag, size = 0x4, scoped, tag = 'scoped memory for tpu_custom_call.1']
    #allocation25 [shape = 'u8[512]{0}', space=vmem, size = 0x400, scoped, tag = 'input window, operand 14, single buffered']
    #allocation26 [shape = 'u8[512]{0}', space=vmem, size = 0x400, scoped, tag = 'input window, operand 15, single buffered']
    #allocation27 [shape = 's32[1]{0}', space=sflag, size = 0x4, scoped, tag = 'scoped memory for tpu_custom_call.1']
    #allocation28 [shape = 'u8[8192]{0}', space=vmem, size = 0x2000, scoped, tag = 'output window, operand 0, single buffered']
    %21 = vsyncpa [#allocation3], 0
    %22 = vsyncpa [#allocation6], 0
    %23 = vsyncpa [#allocation9], 0
    %24 = vsyncpa [#allocation12], 0
    %25 = vsyncpa [#allocation15], 0
    %26 = vsyncpa [#allocation18], 0
    %27 = vsyncpa [#allocation21], 0
    %28 = vsyncpa [#allocation24], 0
    %29 = vsyncpa [#allocation27], 0
    %30 = vsyncpa [#allocation4], 0
    // Predicated region
    $region2: #{tpu_custom_call.1} parent=1 // pred_check
      _
    $region3: #{tpu_custom_call.1} parent=1 // pred_check_branch
      %32 = sbr.rel (0) target = $region5
    $region4: #{tpu_custom_call.1} parent=1 // pred_region
      %s34 = ssub.s32 8192, 8192
      %35 = vsyncadd [#allocation3], %s34
      %s36 = sshll.u32 [#allocation2], 4
      %s37 = int_to_ptr.vmem [resolvable:$true] %s36
      %42 = dma.hbm_to_vmem [thread:$0]  %s0, 8192, %s37, [#allocation3], 128, 128, 8
    $region5: #{tpu_custom_call.1} parent=1 // pred_fallthru
      _
    // Predicated region
    $region6: #{tpu_custom_call.1} parent=1 // pred_check
      _
    $region7: #{tpu_custom_call.1} parent=1 // pred_check_branch
      %44 = sbr.rel (0) target = $region9
    $region8: #{tpu_custom_call.1} parent=1 // pred_region
      %s46 = ssub.s32 48, 48
      %47 = vsyncadd [#allocation6], %s46
      %s48 = sshll.u32 [#allocation5], 4
      %s49 = int_to_ptr.vmem [resolvable:$true] %s48
      %54 = dma.hbm_to_vmem [thread:$0]  %s1, 48, %s49, [#allocation6], 16, 16, 1
    $region9: #{tpu_custom_call.1} parent=1 // pred_fallthru
      _
    // Predicated region
    $region10: #{tpu_custom_call.1} parent=1 // pred_check
      _
    $region11: #{tpu_custom_call.1} parent=1 // pred_check_branch
      %56 = sbr.rel (0) target = $region13
    $region12: #{tpu_custom_call.1} parent=1 // pred_region
      %s58 = ssub.s32 16, 16
      %59 = vsyncadd [#allocation6], %s58
      %s61 = sshll.u32 [#allocation7], 4
      %s62 = int_to_ptr.vmem [resolvable:$true] %s61
      %64 = dma.hbm_to_vmem [thread:$0]  %s2, 16, %s62, [#allocation6]
    $region13: #{tpu_custom_call.1} parent=1 // pred_fallthru
      _
    // Predicated region
    $region14: #{tpu_custom_call.1} parent=1 // pred_check
      _
    $region15: #{tpu_custom_call.1} parent=1 // pred_check_branch
      %66 = sbr.rel (0) target = $region17
    $region16: #{tpu_custom_call.1} parent=1 // pred_region
      %s68 = ssub.s32 16, 16
      %69 = vsyncadd [#allocation9], %s68
      %s71 = sshll.u32 [#allocation8], 4
      %s72 = int_to_ptr.vmem [resolvable:$true] %s71
      %74 = dma.hbm_to_vmem [thread:$0]  %s3, 16, %s72, [#allocation9]
    $region17: #{tpu_custom_call.1} parent=1 // pred_fallthru
      _
    // Predicated region
    $region18: #{tpu_custom_call.1} parent=1 // pred_check
      _
    $region19: #{tpu_custom_call.1} parent=1 // pred_check_branch
      %76 = sbr.rel (0) target = $region21
    $region20: #{tpu_custom_call.1} parent=1 // pred_region
      %s78 = ssub.s32 1536, 1536
      %79 = vsyncadd [#allocation9], %s78
      %s80 = sshll.u32 [#allocation10], 4
      %s81 = int_to_ptr.vmem [resolvable:$true] %s80
      %86 = dma.hbm_to_vmem [thread:$0]  %s4, 1536, %s81, [#allocation9], 128, 128, 8
    $region21: #{tpu_custom_call.1} parent=1 // pred_fallthru
      _
    // Predicated region
    $region22: #{tpu_custom_call.1} parent=1 // pred_check
      _
    $region23: #{tpu_custom_call.1} parent=1 // pred_check_branch
      %88 = sbr.rel (0) target = $region25
    $region24: #{tpu_custom_call.1} parent=1 // pred_region
      %s90 = ssub.s32 16, 16
      %91 = vsyncadd [#allocation12], %s90
      %s93 = sshll.u32 [#allocation11], 4
      %s94 = int_to_ptr.vmem [resolvable:$true] %s93
      %96 = dma.hbm_to_vmem [thread:$0]  %s5, 16, %s94, [#allocation12]
    $region25: #{tpu_custom_call.1} parent=1 // pred_fallthru
      _
    // Predicated region
    $region26: #{tpu_custom_call.1} parent=1 // pred_check
      _
    $region27: #{tpu_custom_call.1} parent=1 // pred_check_branch
      %98 = sbr.rel (0) target = $region29
    $region28: #{tpu_custom_call.1} parent=1 // pred_region
      %s100 = ssub.s32 16, 16
      %101 = vsyncadd [#allocation12], %s100
      %s103 = sshll.u32 [#allocation13], 4
      %s104 = int_to_ptr.vmem [resolvable:$true] %s103
      %106 = dma.hbm_to_vmem [thread:$0]  %s6, 16, %s104, [#allocation12]
    $region29: #{tpu_custom_call.1} parent=1 // pred_fallthru
      _
    // Predicated region
    $region30: #{tpu_custom_call.1} parent=1 // pred_check
      _
    $region31: #{tpu_custom_call.1} parent=1 // pred_check_branch
      %108 = sbr.rel (0) target = $region33
    $region32: #{tpu_custom_call.1} parent=1 // pred_region
      %s110 = ssub.s32 3072, 3072
      %111 = vsyncadd [#allocation15], %s110
      %s112 = sshll.u32 [#allocation14], 4
      %s113 = int_to_ptr.vmem [resolvable:$true] %s112
      %118 = dma.hbm_to_vmem [thread:$0]  %s7, 3072, %s113, [#allocation15], 128, 128, 8
    $region33: #{tpu_custom_call.1} parent=1 // pred_fallthru
      _
    // Predicated region
    $region34: #{tpu_custom_call.1} parent=1 // pred_check
      _
    $region35: #{tpu_custom_call.1} parent=1 // pred_check_branch
      %120 = sbr.rel (0) target = $region37
    $region36: #{tpu_custom_call.1} parent=1 // pred_region
      %s122 = ssub.s32 16, 16
      %123 = vsyncadd [#allocation15], %s122
      %s125 = sshll.u32 [#allocation16], 4
      %s126 = int_to_ptr.vmem [resolvable:$true] %s125
      %128 = dma.hbm_to_vmem [thread:$0]  %s8, 16, %s126, [#allocation15]
    $region37: #{tpu_custom_call.1} parent=1 // pred_fallthru
      _
    // Predicated region
    $region38: #{tpu_custom_call.1} parent=1 // pred_check
      _
    $region39: #{tpu_custom_call.1} parent=1 // pred_check_branch
      %130 = sbr.rel (0) target = $region41
    $region40: #{tpu_custom_call.1} parent=1 // pred_region
      %s132 = ssub.s32 16, 16
      %133 = vsyncadd [#allocation18], %s132
      %s135 = sshll.u32 [#allocation17], 4
      %s136 = int_to_ptr.vmem [resolvable:$true] %s135
      %138 = dma.hbm_to_vmem [thread:$0]  %s9, 16, %s136, [#allocation18]
    $region41: #{tpu_custom_call.1} parent=1 // pred_fallthru
      _
    // Predicated region
    $region42: #{tpu_custom_call.1} parent=1 // pred_check
      _
    $region43: #{tpu_custom_call.1} parent=1 // pred_check_branch
      %140 = sbr.rel (0) target = $region45
    $region44: #{tpu_custom_call.1} parent=1 // pred_region
      %s142 = ssub.s32 16384, 16384
      %143 = vsyncadd [#allocation18], %s142
      %s144 = sshll.u32 [#allocation19], 4
      %s145 = int_to_ptr.vmem [resolvable:$true] %s144
      %150 = dma.hbm_to_vmem [thread:$0]  %s10, 16384, %s145, [#allocation18], 512, 512, 32
    $region45: #{tpu_custom_call.1} parent=1 // pred_fallthru
      _
    // Predicated region
    $region46: #{tpu_custom_call.1} parent=1 // pred_check
      _
    $region47: #{tpu_custom_call.1} parent=1 // pred_check_branch
      %152 = sbr.rel (0) target = $region49
    $region48: #{tpu_custom_call.1} parent=1 // pred_region
      %s154 = ssub.s32 64, 64
      %155 = vsyncadd [#allocation21], %s154
      %s157 = sshll.u32 [#allocation20], 4
      %s158 = int_to_ptr.vmem [resolvable:$true] %s157
      %160 = dma.hbm_to_vmem [thread:$0]  %s11, 64, %s158, [#allocation21]
    $region49: #{tpu_custom_call.1} parent=1 // pred_fallthru
      _
    // Predicated region
    $region50: #{tpu_custom_call.1} parent=1 // pred_check
      _
    $region51: #{tpu_custom_call.1} parent=1 // pred_check_branch
      %162 = sbr.rel (0) target = $region53
    $region52: #{tpu_custom_call.1} parent=1 // pred_region
      %s164 = ssub.s32 64, 64
      %165 = vsyncadd [#allocation21], %s164
      %s167 = sshll.u32 [#allocation22], 4
      %s168 = int_to_ptr.vmem [resolvable:$true] %s167
      %170 = dma.hbm_to_vmem [thread:$0]  %s12, 64, %s168, [#allocation21]
    $region53: #{tpu_custom_call.1} parent=1 // pred_fallthru
      _
    // Predicated region
    $region54: #{tpu_custom_call.1} parent=1 // pred_check
      _
    $region55: #{tpu_custom_call.1} parent=1 // pred_check_branch
      %172 = sbr.rel (0) target = $region57
    $region56: #{tpu_custom_call.1} parent=1 // pred_region
      %s174 = ssub.s32 8192, 8192
      %175 = vsyncadd [#allocation24], %s174
      %s176 = sshll.u32 [#allocation23], 4
      %s177 = int_to_ptr.vmem [resolvable:$true] %s176
      %182 = dma.hbm_to_vmem [thread:$0]  %s13, 8192, %s177, [#allocation24], 128, 128, 8
    $region57: #{tpu_custom_call.1} parent=1 // pred_fallthru
      _
    // Predicated region
    $region58: #{tpu_custom_call.1} parent=1 // pred_check
      _
    $region59: #{tpu_custom_call.1} parent=1 // pred_check_branch
      %184 = sbr.rel (0) target = $region61
    $region60: #{tpu_custom_call.1} parent=1 // pred_region
      %s186 = ssub.s32 16, 16
      %187 = vsyncadd [#allocation24], %s186
      %s189 = sshll.u32 [#allocation25], 4
      %s190 = int_to_ptr.vmem [resolvable:$true] %s189
      %192 = dma.hbm_to_vmem [thread:$0]  %s14, 16, %s190, [#allocation24]
    $region61: #{tpu_custom_call.1} parent=1 // pred_fallthru
      _
    // Predicated region
    $region62: #{tpu_custom_call.1} parent=1 // pred_check
      _
    $region63: #{tpu_custom_call.1} parent=1 // pred_check_branch
      %194 = sbr.rel (0) target = $region65
    $region64: #{tpu_custom_call.1} parent=1 // pred_region
      %s196 = ssub.s32 16, 16
      %197 = vsyncadd [#allocation27], %s196
      %s199 = sshll.u32 [#allocation26], 4
      %s200 = int_to_ptr.vmem [resolvable:$true] %s199
      %202 = dma.hbm_to_vmem [thread:$0]  %s15, 16, %s200, [#allocation27]
    $region65: #{tpu_custom_call.1} parent=1 // pred_fallthru
      _
    // Predicated region
    $region66: #{tpu_custom_call.1} parent=1 // pred_check
      _
    $region67: #{tpu_custom_call.1} parent=1 // pred_check_branch
      %204 = sbr.rel (0) target = $region69
    $region68: #{tpu_custom_call.1} parent=1 // pred_region
      %205 = dma.done [#allocation3], 8192
    $region69: #{tpu_custom_call.1} parent=1 // pred_fallthru
      _
    // Predicated region
    $region70: #{tpu_custom_call.1} parent=1 // pred_check
      _
    $region71: #{tpu_custom_call.1} parent=1 // pred_check_branch
      %207 = sbr.rel (0) target = $region73
    $region72: #{tpu_custom_call.1} parent=1 // pred_region
      %208 = dma.done [#allocation6], 48
    $region73: #{tpu_custom_call.1} parent=1 // pred_fallthru
      _
    // Predicated region
    $region74: #{tpu_custom_call.1} parent=1 // pred_check
      _
    $region75: #{tpu_custom_call.1} parent=1 // pred_check_branch
      %210 = sbr.rel (0) target = $region77
    $region76: #{tpu_custom_call.1} parent=1 // pred_region
      %211 = dma.done [#allocation6], 16
    $region77: #{tpu_custom_call.1} parent=1 // pred_fallthru
      _
    // Predicated region
    $region78: #{tpu_custom_call.1} parent=1 // pred_check
      _
    $region79: #{tpu_custom_call.1} parent=1 // pred_check_branch
      %213 = sbr.rel (0) target = $region81
    $region80: #{tpu_custom_call.1} parent=1 // pred_region
      %214 = dma.done [#allocation9], 16
    $region81: #{tpu_custom_call.1} parent=1 // pred_fallthru
      _
    // Predicated region
    $region82: #{tpu_custom_call.1} parent=1 // pred_check
      _
    $region83: #{tpu_custom_call.1} parent=1 // pred_check_branch
      %216 = sbr.rel (0) target = $region85
    $region84: #{tpu_custom_call.1} parent=1 // pred_region
      %217 = dma.done [#allocation9], 1536
    $region85: #{tpu_custom_call.1} parent=1 // pred_fallthru
      _
    // Predicated region
    $region86: #{tpu_custom_call.1} parent=1 // pred_check
      _
    $region87: #{tpu_custom_call.1} parent=1 // pred_check_branch
      %219 = sbr.rel (0) target = $region89
    $region88: #{tpu_custom_call.1} parent=1 // pred_region
      %220 = dma.done [#allocation12], 16
    $region89: #{tpu_custom_call.1} parent=1 // pred_fallthru
      _
    // Predicated region
    $region90: #{tpu_custom_call.1} parent=1 // pred_check
      _
    $region91: #{tpu_custom_call.1} parent=1 // pred_check_branch
      %222 = sbr.rel (0) target = $region93
    $region92: #{tpu_custom_call.1} parent=1 // pred_region
      %223 = dma.done [#allocation12], 16
    $region93: #{tpu_custom_call.1} parent=1 // pred_fallthru
      _
    // Predicated region
    $region94: #{tpu_custom_call.1} parent=1 // pred_check
      _
    $region95: #{tpu_custom_call.1} parent=1 // pred_check_branch
      %225 = sbr.rel (0) target = $region97
    $region96: #{tpu_custom_call.1} parent=1 // pred_region
      %226 = dma.done [#allocation15], 3072
    $region97: #{tpu_custom_call.1} parent=1 // pred_fallthru
      _
    // Predicated region
    $region98: #{tpu_custom_call.1} parent=1 // pred_check
      _
    $region99: #{tpu_custom_call.1} parent=1 // pred_check_branch
      %228 = sbr.rel (0) target = $region101
    $region100: #{tpu_custom_call.1} parent=1 // pred_region
      %229 = dma.done [#allocation15], 16
    $region101: #{tpu_custom_call.1} parent=1 // pred_fallthru
      _
    // Predicated region
    $region102: #{tpu_custom_call.1} parent=1 // pred_check
      _
    $region103: #{tpu_custom_call.1} parent=1 // pred_check_branch
      %231 = sbr.rel (0) target = $region105
    $region104: #{tpu_custom_call.1} parent=1 // pred_region
      %232 = dma.done [#allocation18], 16
    $region105: #{tpu_custom_call.1} parent=1 // pred_fallthru
      _
    // Predicated region
    $region106: #{tpu_custom_call.1} parent=1 // pred_check
      _
    $region107: #{tpu_custom_call.1} parent=1 // pred_check_branch
      %234 = sbr.rel (0) target = $region109
    $region108: #{tpu_custom_call.1} parent=1 // pred_region
      %235 = dma.done [#allocation18], 16384
    $region109: #{tpu_custom_call.1} parent=1 // pred_fallthru
      _
    // Predicated region
    $region110: #{tpu_custom_call.1} parent=1 // pred_check
      _
    $region111: #{tpu_custom_call.1} parent=1 // pred_check_branch
      %237 = sbr.rel (0) target = $region113
    $region112: #{tpu_custom_call.1} parent=1 // pred_region
      %238 = dma.done [#allocation21], 64
    $region113: #{tpu_custom_call.1} parent=1 // pred_fallthru
      _
    // Predicated region
    $region114: #{tpu_custom_call.1} parent=1 // pred_check
      _
    $region115: #{tpu_custom_call.1} parent=1 // pred_check_branch
      %240 = sbr.rel (0) target = $region117
    $region116: #{tpu_custom_call.1} parent=1 // pred_region
      %241 = dma.done [#allocation21], 64
    $region117: #{tpu_custom_call.1} parent=1 // pred_fallthru
      _
    // Predicated region
    $region118: #{tpu_custom_call.1} parent=1 // pred_check
      _
    $region119: #{tpu_custom_call.1} parent=1 // pred_check_branch
      %243 = sbr.rel (0) target = $region121
    $region120: #{tpu_custom_call.1} parent=1 // pred_region
      %244 = dma.done [#allocation24], 8192
    $region121: #{tpu_custom_call.1} parent=1 // pred_fallthru
      _
    // Predicated region
    $region122: #{tpu_custom_call.1} parent=1 // pred_check
      _
    $region123: #{tpu_custom_call.1} parent=1 // pred_check_branch
      %246 = sbr.rel (0) target = $region125
    $region124: #{tpu_custom_call.1} parent=1 // pred_region
      %247 = dma.done [#allocation24], 16
    $region125: #{tpu_custom_call.1} parent=1 // pred_fallthru
      _
    // Predicated region
    $region126: #{tpu_custom_call.1} parent=1 // pred_check
      _
    $region127: #{tpu_custom_call.1} parent=1 // pred_check_branch
      %249 = sbr.rel (0) target = $region129
    $region128: #{tpu_custom_call.1} parent=1 // pred_region
      %250 = dma.done [#allocation27], 16
    $region129: #{tpu_custom_call.1} parent=1 // pred_fallthru
      _
    %v251 = vld [vmem:[#allocation2] sm:$0xff]
    %v252 = vld [vmem:[#allocation2 + $0x8] sm:$0xff]
    %v253 = vld [vmem:[#allocation2 + $0x10] sm:$0xff]
    %v254 = vld [vmem:[#allocation2 + $0x18] sm:$0xff]
    %v255 = vld [vmem:[#allocation2 + $0x20] sm:$0xff]
    %v256 = vld [vmem:[#allocation2 + $0x28] sm:$0xff]
    %v257 = vld [vmem:[#allocation2 + $0x30] sm:$0xff]
    %v258 = vld [vmem:[#allocation2 + $0x38] sm:$0xff]
    %v259 = vld [vmem:[#allocation2 + $0x40] sm:$0xff]
    %v260 = vld [vmem:[#allocation2 + $0x48] sm:$0xff]
    %v261 = vld [vmem:[#allocation2 + $0x50] sm:$0xff]
    %v262 = vld [vmem:[#allocation2 + $0x58] sm:$0xff]
    %v263 = vld [vmem:[#allocation2 + $0x60] sm:$0xff]
    %v264 = vld [vmem:[#allocation2 + $0x68] sm:$0xff]
    %v265 = vld [vmem:[#allocation2 + $0x70] sm:$0xff]
    %v266 = vld [vmem:[#allocation2 + $0x78] sm:$0xff]
    %v267 = vld [vmem:[#allocation2 + $0x80] sm:$0xff]
    %v268 = vld [vmem:[#allocation2 + $0x88] sm:$0xff]
    %v269 = vld [vmem:[#allocation2 + $0x90] sm:$0xff]
    %v270 = vld [vmem:[#allocation2 + $0x98] sm:$0xff]
    %v271 = vld [vmem:[#allocation2 + $0xa0] sm:$0xff]
    %v272 = vld [vmem:[#allocation2 + $0xa8] sm:$0xff]
    %v273 = vld [vmem:[#allocation2 + $0xb0] sm:$0xff]
    %v274 = vld [vmem:[#allocation2 + $0xb8] sm:$0xff]
    %v275 = vld [vmem:[#allocation2 + $0xc0] sm:$0xff]
    %v276 = vld [vmem:[#allocation2 + $0xc8] sm:$0xff]
    %v277 = vld [vmem:[#allocation2 + $0xd0] sm:$0xff]
    %v278 = vld [vmem:[#allocation2 + $0xd8] sm:$0xff]
    %v279 = vld [vmem:[#allocation2 + $0xe0] sm:$0xff]
    %v280 = vld [vmem:[#allocation2 + $0xe8] sm:$0xff]
    %v281 = vld [vmem:[#allocation2 + $0xf0] sm:$0xff]
    %v282 = vld [vmem:[#allocation2 + $0xf8] sm:$0xff]
    %v283 = vld [vmem:[#allocation2 + $0x100] sm:$0xff]
    %v284 = vld [vmem:[#allocation2 + $0x108] sm:$0xff]
    %v285 = vld [vmem:[#allocation2 + $0x110] sm:$0xff]
    %v286 = vld [vmem:[#allocation2 + $0x118] sm:$0xff]
    %v287 = vld [vmem:[#allocation2 + $0x120] sm:$0xff]
    %v288 = vld [vmem:[#allocation2 + $0x128] sm:$0xff]
    %v289 = vld [vmem:[#allocation2 + $0x130] sm:$0xff]
    %v290 = vld [vmem:[#allocation2 + $0x138] sm:$0xff]
    %v291 = vld [vmem:[#allocation2 + $0x140] sm:$0xff]
    %v292 = vld [vmem:[#allocation2 + $0x148] sm:$0xff]
    %v293 = vld [vmem:[#allocation2 + $0x150] sm:$0xff]
    %v294 = vld [vmem:[#allocation2 + $0x158] sm:$0xff]
    %v295 = vld [vmem:[#allocation2 + $0x160] sm:$0xff]
    %v296 = vld [vmem:[#allocation2 + $0x168] sm:$0xff]
    %v297 = vld [vmem:[#allocation2 + $0x170] sm:$0xff]
    %v298 = vld [vmem:[#allocation2 + $0x178] sm:$0xff]
    %v299 = vld [vmem:[#allocation2 + $0x180] sm:$0xff]
    %v300 = vld [vmem:[#allocation2 + $0x188] sm:$0xff]
    %v301 = vld [vmem:[#allocation2 + $0x190] sm:$0xff]
    %v302 = vld [vmem:[#allocation2 + $0x198] sm:$0xff]
    %v303 = vld [vmem:[#allocation2 + $0x1a0] sm:$0xff]
    %v304 = vld [vmem:[#allocation2 + $0x1a8] sm:$0xff]
    %v305 = vld [vmem:[#allocation2 + $0x1b0] sm:$0xff]
    %v306 = vld [vmem:[#allocation2 + $0x1b8] sm:$0xff]
    %v307 = vld [vmem:[#allocation2 + $0x1c0] sm:$0xff]
    %v308 = vld [vmem:[#allocation2 + $0x1c8] sm:$0xff]
    %v309 = vld [vmem:[#allocation2 + $0x1d0] sm:$0xff]
    %v310 = vld [vmem:[#allocation2 + $0x1d8] sm:$0xff]
    %v311 = vld [vmem:[#allocation2 + $0x1e0] sm:$0xff]
    %v312 = vld [vmem:[#allocation2 + $0x1e8] sm:$0xff]
    %v313 = vld [vmem:[#allocation2 + $0x1f0] sm:$0xff]
    %v314 = vld [vmem:[#allocation2 + $0x1f8] sm:$0xff]
    %v315 = vld [vmem:[#allocation5] sm:$0x1]
    %v316 = vld [vmem:[#allocation5 + $0x1] sm:$0x1]
    %v317 = vld [vmem:[#allocation5 + $0x2] sm:$0x1]
    %319 = vset.pattern.permute.xlu0 0
    %320 = vperm.xlu0 %319, %v251
    %v321 = vpop.permute.xlu0 %320
    %324 = vset.pattern.permute.xlu0 0
    %325 = vperm.xlu0 %324, %v252
    %v326 = vpop.permute.xlu0 %325
    %329 = vset.pattern.permute.xlu0 0
    %330 = vperm.xlu0 %329, %v253
    %v331 = vpop.permute.xlu0 %330
    %334 = vset.pattern.permute.xlu0 0
    %335 = vperm.xlu0 %334, %v254
    %v336 = vpop.permute.xlu0 %335
    %339 = vset.pattern.permute.xlu0 0
    %340 = vperm.xlu0 %339, %v255
    %v341 = vpop.permute.xlu0 %340
    %344 = vset.pattern.permute.xlu0 0
    %345 = vperm.xlu0 %344, %v256
    %v346 = vpop.permute.xlu0 %345
    %349 = vset.pattern.permute.xlu0 0
    %350 = vperm.xlu0 %349, %v257
    %v351 = vpop.permute.xlu0 %350
    %354 = vset.pattern.permute.xlu0 0
    %355 = vperm.xlu0 %354, %v258
    %v356 = vpop.permute.xlu0 %355
    %359 = vset.pattern.permute.xlu0 0
    %360 = vperm.xlu0 %359, %v259
    %v361 = vpop.permute.xlu0 %360
    %364 = vset.pattern.permute.xlu0 0
    %365 = vperm.xlu0 %364, %v260
    %v366 = vpop.permute.xlu0 %365
    %369 = vset.pattern.permute.xlu0 0
    %370 = vperm.xlu0 %369, %v261
    %v371 = vpop.permute.xlu0 %370
    %374 = vset.pattern.permute.xlu0 0
    %375 = vperm.xlu0 %374, %v262
    %v376 = vpop.permute.xlu0 %375
    %379 = vset.pattern.permute.xlu0 0
    %380 = vperm.xlu0 %379, %v263
    %v381 = vpop.permute.xlu0 %380
    %384 = vset.pattern.permute.xlu0 0
    %385 = vperm.xlu0 %384, %v264
    %v386 = vpop.permute.xlu0 %385
    %389 = vset.pattern.permute.xlu0 0
    %390 = vperm.xlu0 %389, %v265
    %v391 = vpop.permute.xlu0 %390
    %394 = vset.pattern.permute.xlu0 0
    %395 = vperm.xlu0 %394, %v266
    %v396 = vpop.permute.xlu0 %395
    %399 = vset.pattern.permute.xlu0 0
    %400 = vperm.xlu0 %399, %v267
    %v401 = vpop.permute.xlu0 %400
    %404 = vset.pattern.permute.xlu0 0
    %405 = vperm.xlu0 %404, %v268
    %v406 = vpop.permute.xlu0 %405
    %409 = vset.pattern.permute.xlu0 0
    %410 = vperm.xlu0 %409, %v269
    %v411 = vpop.permute.xlu0 %410
    %414 = vset.pattern.permute.xlu0 0
    %415 = vperm.xlu0 %414, %v270
    %v416 = vpop.permute.xlu0 %415
    %419 = vset.pattern.permute.xlu0 0
    %420 = vperm.xlu0 %419, %v271
    %v421 = vpop.permute.xlu0 %420
    %424 = vset.pattern.permute.xlu0 0
    %425 = vperm.xlu0 %424, %v272
    %v426 = vpop.permute.xlu0 %425
    %429 = vset.pattern.permute.xlu0 0
    %430 = vperm.xlu0 %429, %v273
    %v431 = vpop.permute.xlu0 %430
    %434 = vset.pattern.permute.xlu0 0
    %435 = vperm.xlu0 %434, %v274
    %v436 = vpop.permute.xlu0 %435
    %439 = vset.pattern.permute.xlu0 0
    %440 = vperm.xlu0 %439, %v275
    %v441 = vpop.permute.xlu0 %440
    %444 = vset.pattern.permute.xlu0 0
    %445 = vperm.xlu0 %444, %v276
    %v446 = vpop.permute.xlu0 %445
    %449 = vset.pattern.permute.xlu0 0
    %450 = vperm.xlu0 %449, %v277
    %v451 = vpop.permute.xlu0 %450
    %454 = vset.pattern.permute.xlu0 0
    %455 = vperm.xlu0 %454, %v278
    %v456 = vpop.permute.xlu0 %455
    %459 = vset.pattern.permute.xlu0 0
    %460 = vperm.xlu0 %459, %v279
    %v461 = vpop.permute.xlu0 %460
    %464 = vset.pattern.permute.xlu0 0
    %465 = vperm.xlu0 %464, %v280
    %v466 = vpop.permute.xlu0 %465
    %469 = vset.pattern.permute.xlu0 0
    %470 = vperm.xlu0 %469, %v281
    %v471 = vpop.permute.xlu0 %470
    %474 = vset.pattern.permute.xlu0 0
    %475 = vperm.xlu0 %474, %v282
    %v476 = vpop.permute.xlu0 %475
    %479 = vset.pattern.permute.xlu0 0
    %480 = vperm.xlu0 %479, %v283
    %v481 = vpop.permute.xlu0 %480
    %484 = vset.pattern.permute.xlu0 0
    %485 = vperm.xlu0 %484, %v284
    %v486 = vpop.permute.xlu0 %485
    %489 = vset.pattern.permute.xlu0 0
    %490 = vperm.xlu0 %489, %v285
    %v491 = vpop.permute.xlu0 %490
    %494 = vset.pattern.permute.xlu0 0
    %495 = vperm.xlu0 %494, %v286
    %v496 = vpop.permute.xlu0 %495
    %499 = vset.pattern.permute.xlu0 0
    %500 = vperm.xlu0 %499, %v287
    %v501 = vpop.permute.xlu0 %500
    %504 = vset.pattern.permute.xlu0 0
    %505 = vperm.xlu0 %504, %v288
    %v506 = vpop.permute.xlu0 %505
    %509 = vset.pattern.permute.xlu0 0
    %510 = vperm.xlu0 %509, %v289
    %v511 = vpop.permute.xlu0 %510
    %514 = vset.pattern.permute.xlu0 0
    %515 = vperm.xlu0 %514, %v290
    %v516 = vpop.permute.xlu0 %515
    %519 = vset.pattern.permute.xlu0 0
    %520 = vperm.xlu0 %519, %v291
    %v521 = vpop.permute.xlu0 %520
    %524 = vset.pattern.permute.xlu0 0
    %525 = vperm.xlu0 %524, %v292
    %v526 = vpop.permute.xlu0 %525
    %529 = vset.pattern.permute.xlu0 0
    %530 = vperm.xlu0 %529, %v293
    %v531 = vpop.permute.xlu0 %530
    %534 = vset.pattern.permute.xlu0 0
    %535 = vperm.xlu0 %534, %v294
    %v536 = vpop.permute.xlu0 %535
    %539 = vset.pattern.permute.xlu0 0
    %540 = vperm.xlu0 %539, %v295
    %v541 = vpop.permute.xlu0 %540
    %544 = vset.pattern.permute.xlu0 0
    %545 = vperm.xlu0 %544, %v296
    %v546 = vpop.permute.xlu0 %545
    %549 = vset.pattern.permute.xlu0 0
    %550 = vperm.xlu0 %549, %v297
    %v551 = vpop.permute.xlu0 %550
    %554 = vset.pattern.permute.xlu0 0
    %555 = vperm.xlu0 %554, %v298
    %v556 = vpop.permute.xlu0 %555
    %559 = vset.pattern.permute.xlu0 0
    %560 = vperm.xlu0 %559, %v299
    %v561 = vpop.permute.xlu0 %560
    %564 = vset.pattern.permute.xlu0 0
    %565 = vperm.xlu0 %564, %v300
    %v566 = vpop.permute.xlu0 %565
    %569 = vset.pattern.permute.xlu0 0
    %570 = vperm.xlu0 %569, %v301
    %v571 = vpop.permute.xlu0 %570
    %574 = vset.pattern.permute.xlu0 0
    %575 = vperm.xlu0 %574, %v302
    %v576 = vpop.permute.xlu0 %575
    %579 = vset.pattern.permute.xlu0 0
    %580 = vperm.xlu0 %579, %v303
    %v581 = vpop.permute.xlu0 %580
    %584 = vset.pattern.permute.xlu0 0
    %585 = vperm.xlu0 %584, %v304
    %v586 = vpop.permute.xlu0 %585
    %589 = vset.pattern.permute.xlu0 0
    %590 = vperm.xlu0 %589, %v305
    %v591 = vpop.permute.xlu0 %590
    %594 = vset.pattern.permute.xlu0 0
    %595 = vperm.xlu0 %594, %v306
    %v596 = vpop.permute.xlu0 %595
    %599 = vset.pattern.permute.xlu0 0
    %600 = vperm.xlu0 %599, %v307
    %v601 = vpop.permute.xlu0 %600
    %604 = vset.pattern.permute.xlu0 0
    %605 = vperm.xlu0 %604, %v308
    %v606 = vpop.permute.xlu0 %605
    %609 = vset.pattern.permute.xlu0 0
    %610 = vperm.xlu0 %609, %v309
    %v611 = vpop.permute.xlu0 %610
    %614 = vset.pattern.permute.xlu0 0
    %615 = vperm.xlu0 %614, %v310
    %v616 = vpop.permute.xlu0 %615
    %v619 = vlaneseq
    %v620 = vshrl.u32 %v619, 7
    %v621 = vsub.s32 0, %v620
    %v622 = vrot.slane %v315, %v621
    %v624 = vmul.f32 %v321, %v622
    %v625 = vmul.f32 %v326, %v622
    %v626 = vmul.f32 %v331, %v622
    %v627 = vmul.f32 %v336, %v622
    %v628 = vmul.f32 %v341, %v622
    %v629 = vmul.f32 %v346, %v622
    %v630 = vmul.f32 %v351, %v622
    %v631 = vmul.f32 %v356, %v622
    %v632 = vmul.f32 %v361, %v622
    %v633 = vmul.f32 %v366, %v622
    %v634 = vmul.f32 %v371, %v622
    %v635 = vmul.f32 %v376, %v622
    %v636 = vmul.f32 %v381, %v622
    %v637 = vmul.f32 %v386, %v622
    %v638 = vmul.f32 %v391, %v622
    %v639 = vmul.f32 %v396, %v622
    %v640 = vmul.f32 %v401, %v622
    %v641 = vmul.f32 %v406, %v622
    %v642 = vmul.f32 %v411, %v622
    %v643 = vmul.f32 %v416, %v622
    %v644 = vmul.f32 %v421, %v622
    %v645 = vmul.f32 %v426, %v622
    %v646 = vmul.f32 %v431, %v622
    %v647 = vmul.f32 %v436, %v622
    %v648 = vmul.f32 %v441, %v622
    %v649 = vmul.f32 %v446, %v622
    %v650 = vmul.f32 %v451, %v622
    %v651 = vmul.f32 %v456, %v622
    %v652 = vmul.f32 %v461, %v622
    %v653 = vmul.f32 %v466, %v622
    %v654 = vmul.f32 %v471, %v622
    %v655 = vmul.f32 %v476, %v622
    %v656 = vmul.f32 %v481, %v622
    %v657 = vmul.f32 %v486, %v622
    %v658 = vmul.f32 %v491, %v622
    %v659 = vmul.f32 %v496, %v622
    %v660 = vmul.f32 %v501, %v622
    %v661 = vmul.f32 %v506, %v622
    %v662 = vmul.f32 %v511, %v622
    %v663 = vmul.f32 %v516, %v622
    %v664 = vmul.f32 %v521, %v622
    %v665 = vmul.f32 %v526, %v622
    %v666 = vmul.f32 %v531, %v622
    %v667 = vmul.f32 %v536, %v622
    %v668 = vmul.f32 %v541, %v622
    %v669 = vmul.f32 %v546, %v622
    %v670 = vmul.f32 %v551, %v622
    %v671 = vmul.f32 %v556, %v622
    %v672 = vmul.f32 %v561, %v622
    %v673 = vmul.f32 %v566, %v622
    %v674 = vmul.f32 %v571, %v622
    %v675 = vmul.f32 %v576, %v622
    %v676 = vmul.f32 %v581, %v622
    %v677 = vmul.f32 %v586, %v622
    %v678 = vmul.f32 %v591, %v622
    %v679 = vmul.f32 %v596, %v622
    %v680 = vmul.f32 %v601, %v622
    %v681 = vmul.f32 %v606, %v622
    %v682 = vmul.f32 %v611, %v622
    %v683 = vmul.f32 %v616, %v622
    %685 = vset.pattern.permute.xlu0 0
    %686 = vperm.xlu0 %685, %v311
    %v687 = vpop.permute.xlu0 %686
    %690 = vset.pattern.permute.xlu0 0
    %691 = vperm.xlu0 %690, %v312
    %v692 = vpop.permute.xlu0 %691
    %v695 = vlaneseq
    %v696 = vshrl.u32 %v695, 7
    %v697 = vsub.s32 0, %v696
    %v698 = vrot.slane %v316, %v697
    %v700 = vmul.f32 %v331, %v698
    %v701 = vmul.f32 %v336, %v698
    %v702 = vmul.f32 %v341, %v698
    %v703 = vmul.f32 %v346, %v698
    %v704 = vmul.f32 %v351, %v698
    %v705 = vmul.f32 %v356, %v698
    %v706 = vmul.f32 %v361, %v698
    %v707 = vmul.f32 %v366, %v698
    %v708 = vmul.f32 %v371, %v698
    %v709 = vmul.f32 %v376, %v698
    %v710 = vmul.f32 %v381, %v698
    %v711 = vmul.f32 %v386, %v698
    %v712 = vmul.f32 %v391, %v698
    %v713 = vmul.f32 %v396, %v698
    %v714 = vmul.f32 %v401, %v698
    %v715 = vmul.f32 %v406, %v698
    %v716 = vmul.f32 %v411, %v698
    %v717 = vmul.f32 %v416, %v698
    %v718 = vmul.f32 %v421, %v698
    %v719 = vmul.f32 %v426, %v698
    %v720 = vmul.f32 %v431, %v698
    %v721 = vmul.f32 %v436, %v698
    %v722 = vmul.f32 %v441, %v698
    %v723 = vmul.f32 %v446, %v698
    %v724 = vmul.f32 %v451, %v698
    %v725 = vmul.f32 %v456, %v698
    %v726 = vmul.f32 %v461, %v698
    %v727 = vmul.f32 %v466, %v698
    %v728 = vmul.f32 %v471, %v698
    %v729 = vmul.f32 %v476, %v698
    %v730 = vmul.f32 %v481, %v698
    %v731 = vmul.f32 %v486, %v698
    %v732 = vmul.f32 %v491, %v698
    %v733 = vmul.f32 %v496, %v698
    %v734 = vmul.f32 %v501, %v698
    %v735 = vmul.f32 %v506, %v698
    %v736 = vmul.f32 %v511, %v698
    %v737 = vmul.f32 %v516, %v698
    %v738 = vmul.f32 %v521, %v698
    %v739 = vmul.f32 %v526, %v698
    %v740 = vmul.f32 %v531, %v698
    %v741 = vmul.f32 %v536, %v698
    %v742 = vmul.f32 %v541, %v698
    %v743 = vmul.f32 %v546, %v698
    %v744 = vmul.f32 %v551, %v698
    %v745 = vmul.f32 %v556, %v698
    %v746 = vmul.f32 %v561, %v698
    %v747 = vmul.f32 %v566, %v698
    %v748 = vmul.f32 %v571, %v698
    %v749 = vmul.f32 %v576, %v698
    %v750 = vmul.f32 %v581, %v698
    %v751 = vmul.f32 %v586, %v698
    %v752 = vmul.f32 %v591, %v698
    %v753 = vmul.f32 %v596, %v698
    %v754 = vmul.f32 %v601, %v698
    %v755 = vmul.f32 %v606, %v698
    %v756 = vmul.f32 %v611, %v698
    %v757 = vmul.f32 %v616, %v698
    %v758 = vmul.f32 %v687, %v698
    %v759 = vmul.f32 %v692, %v698
    %v760 = vadd.f32 %v624, %v700
    %v761 = vadd.f32 %v625, %v701
    %v762 = vadd.f32 %v626, %v702
    %v763 = vadd.f32 %v627, %v703
    %v764 = vadd.f32 %v628, %v704
    %v765 = vadd.f32 %v629, %v705
    %v766 = vadd.f32 %v630, %v706
    %v767 = vadd.f32 %v631, %v707
    %v768 = vadd.f32 %v632, %v708
    %v769 = vadd.f32 %v633, %v709
    %v770 = vadd.f32 %v634, %v710
    %v771 = vadd.f32 %v635, %v711
    %v772 = vadd.f32 %v636, %v712
    %v773 = vadd.f32 %v637, %v713
    %v774 = vadd.f32 %v638, %v714
    %v775 = vadd.f32 %v639, %v715
    %v776 = vadd.f32 %v640, %v716
    %v777 = vadd.f32 %v641, %v717
    %v778 = vadd.f32 %v642, %v718
    %v779 = vadd.f32 %v643, %v719
    %v780 = vadd.f32 %v644, %v720
    %v781 = vadd.f32 %v645, %v721
    %v782 = vadd.f32 %v646, %v722
    %v783 = vadd.f32 %v647, %v723
    %v784 = vadd.f32 %v648, %v724
    %v785 = vadd.f32 %v649, %v725
    %v786 = vadd.f32 %v650, %v726
    %v787 = vadd.f32 %v651, %v727
    %v788 = vadd.f32 %v652, %v728
    %v789 = vadd.f32 %v653, %v729
    %v790 = vadd.f32 %v654, %v730
    %v791 = vadd.f32 %v655, %v731
    %v792 = vadd.f32 %v656, %v732
    %v793 = vadd.f32 %v657, %v733
    %v794 = vadd.f32 %v658, %v734
    %v795 = vadd.f32 %v659, %v735
    %v796 = vadd.f32 %v660, %v736
    %v797 = vadd.f32 %v661, %v737
    %v798 = vadd.f32 %v662, %v738
    %v799 = vadd.f32 %v663, %v739
    %v800 = vadd.f32 %v664, %v740
    %v801 = vadd.f32 %v665, %v741
    %v802 = vadd.f32 %v666, %v742
    %v803 = vadd.f32 %v667, %v743
    %v804 = vadd.f32 %v668, %v744
    %v805 = vadd.f32 %v669, %v745
    %v806 = vadd.f32 %v670, %v746
    %v807 = vadd.f32 %v671, %v747
    %v808 = vadd.f32 %v672, %v748
    %v809 = vadd.f32 %v673, %v749
    %v810 = vadd.f32 %v674, %v750
    %v811 = vadd.f32 %v675, %v751
    %v812 = vadd.f32 %v676, %v752
    %v813 = vadd.f32 %v677, %v753
    %v814 = vadd.f32 %v678, %v754
    %v815 = vadd.f32 %v679, %v755
    %v816 = vadd.f32 %v680, %v756
    %v817 = vadd.f32 %v681, %v757
    %v818 = vadd.f32 %v682, %v758
    %v819 = vadd.f32 %v683, %v759
    %821 = vset.pattern.permute.xlu0 0
    %822 = vperm.xlu0 %821, %v313
    %v823 = vpop.permute.xlu0 %822
    %826 = vset.pattern.permute.xlu0 0
    %827 = vperm.xlu0 %826, %v314
    %v828 = vpop.permute.xlu0 %827
    %v831 = vlaneseq
    %v832 = vshrl.u32 %v831, 7
    %v833 = vsub.s32 0, %v832
    %v834 = vrot.slane %v317, %v833
    %v836 = vmul.f32 %v341, %v834
    %v837 = vmul.f32 %v346, %v834
    %v838 = vmul.f32 %v351, %v834
    %v839 = vmul.f32 %v356, %v834
    %v840 = vmul.f32 %v361, %v834
    %v841 = vmul.f32 %v366, %v834
    %v842 = vmul.f32 %v371, %v834
    %v843 = vmul.f32 %v376, %v834
    %v844 = vmul.f32 %v381, %v834
    %v845 = vmul.f32 %v386, %v834
    %v846 = vmul.f32 %v391, %v834
    %v847 = vmul.f32 %v396, %v834
    %v848 = vmul.f32 %v401, %v834
    %v849 = vmul.f32 %v406, %v834
    %v850 = vmul.f32 %v411, %v834
    %v851 = vmul.f32 %v416, %v834
    %v852 = vmul.f32 %v421, %v834
    %v853 = vmul.f32 %v426, %v834
    %v854 = vmul.f32 %v431, %v834
    %v855 = vmul.f32 %v436, %v834
    %v856 = vmul.f32 %v441, %v834
    %v857 = vmul.f32 %v446, %v834
    %v858 = vmul.f32 %v451, %v834
    %v859 = vmul.f32 %v456, %v834
    %v860 = vmul.f32 %v461, %v834
    %v861 = vmul.f32 %v466, %v834
    %v862 = vmul.f32 %v471, %v834
    %v863 = vmul.f32 %v476, %v834
    %v864 = vmul.f32 %v481, %v834
    %v865 = vmul.f32 %v486, %v834
    %v866 = vmul.f32 %v491, %v834
    %v867 = vmul.f32 %v496, %v834
    %v868 = vmul.f32 %v501, %v834
    %v869 = vmul.f32 %v506, %v834
    %v870 = vmul.f32 %v511, %v834
    %v871 = vmul.f32 %v516, %v834
    %v872 = vmul.f32 %v521, %v834
    %v873 = vmul.f32 %v526, %v834
    %v874 = vmul.f32 %v531, %v834
    %v875 = vmul.f32 %v536, %v834
    %v876 = vmul.f32 %v541, %v834
    %v877 = vmul.f32 %v546, %v834
    %v878 = vmul.f32 %v551, %v834
    %v879 = vmul.f32 %v556, %v834
    %v880 = vmul.f32 %v561, %v834
    %v881 = vmul.f32 %v566, %v834
    %v882 = vmul.f32 %v571, %v834
    %v883 = vmul.f32 %v576, %v834
    %v884 = vmul.f32 %v581, %v834
    %v885 = vmul.f32 %v586, %v834
    %v886 = vmul.f32 %v591, %v834
    %v887 = vmul.f32 %v596, %v834
    %v888 = vmul.f32 %v601, %v834
    %v889 = vmul.f32 %v606, %v834
    %v890 = vmul.f32 %v611, %v834
    %v891 = vmul.f32 %v616, %v834
    %v892 = vmul.f32 %v687, %v834
    %v893 = vmul.f32 %v692, %v834
    %v894 = vmul.f32 %v823, %v834
    %v895 = vmul.f32 %v828, %v834
    %v896 = vadd.f32 %v760, %v836
    %v897 = vadd.f32 %v761, %v837
    %v898 = vadd.f32 %v762, %v838
    %v899 = vadd.f32 %v763, %v839
    %v900 = vadd.f32 %v764, %v840
    %v901 = vadd.f32 %v765, %v841
    %v902 = vadd.f32 %v766, %v842
    %v903 = vadd.f32 %v767, %v843
    %v904 = vadd.f32 %v768, %v844
    %v905 = vadd.f32 %v769, %v845
    %v906 = vadd.f32 %v770, %v846
    %v907 = vadd.f32 %v771, %v847
    %v908 = vadd.f32 %v772, %v848
    %v909 = vadd.f32 %v773, %v849
    %v910 = vadd.f32 %v774, %v850
    %v911 = vadd.f32 %v775, %v851
    %v912 = vadd.f32 %v776, %v852
    %v913 = vadd.f32 %v777, %v853
    %v914 = vadd.f32 %v778, %v854
    %v915 = vadd.f32 %v779, %v855
    %v916 = vadd.f32 %v780, %v856
    %v917 = vadd.f32 %v781, %v857
    %v918 = vadd.f32 %v782, %v858
    %v919 = vadd.f32 %v783, %v859
    %v920 = vadd.f32 %v784, %v860
    %v921 = vadd.f32 %v785, %v861
    %v922 = vadd.f32 %v786, %v862
    %v923 = vadd.f32 %v787, %v863
    %v924 = vadd.f32 %v788, %v864
    %v925 = vadd.f32 %v789, %v865
    %v926 = vadd.f32 %v790, %v866
    %v927 = vadd.f32 %v791, %v867
    %v928 = vadd.f32 %v792, %v868
    %v929 = vadd.f32 %v793, %v869
    %v930 = vadd.f32 %v794, %v870
    %v931 = vadd.f32 %v795, %v871
    %v932 = vadd.f32 %v796, %v872
    %v933 = vadd.f32 %v797, %v873
    %v934 = vadd.f32 %v798, %v874
    %v935 = vadd.f32 %v799, %v875
    %v936 = vadd.f32 %v800, %v876
    %v937 = vadd.f32 %v801, %v877
    %v938 = vadd.f32 %v802, %v878
    %v939 = vadd.f32 %v803, %v879
    %v940 = vadd.f32 %v804, %v880
    %v941 = vadd.f32 %v805, %v881
    %v942 = vadd.f32 %v806, %v882
    %v943 = vadd.f32 %v807, %v883
    %v944 = vadd.f32 %v808, %v884
    %v945 = vadd.f32 %v809, %v885
    %v946 = vadd.f32 %v810, %v886
    %v947 = vadd.f32 %v811, %v887
    %v948 = vadd.f32 %v812, %v888
    %v949 = vadd.f32 %v813, %v889
    %v950 = vadd.f32 %v814, %v890
    %v951 = vadd.f32 %v815, %v891
    %v952 = vadd.f32 %v816, %v892
    %v953 = vadd.f32 %v817, %v893
    %v954 = vadd.f32 %v818, %v894
    %v955 = vadd.f32 %v819, %v895
    %v956 = vld [vmem:[#allocation7] sm:$0x1]
    %v958 = vlaneseq
    %v959 = vshrl.u32 %v958, 7
    %v960 = vsub.s32 0, %v959
    %v961 = vrot.slane %v956, %v960
    %v963 = vmul.f32 %v896, %v961
    %v964 = vmul.f32 %v897, %v961
    %v965 = vmul.f32 %v898, %v961
    %v966 = vmul.f32 %v899, %v961
    %v967 = vmul.f32 %v900, %v961
    %v968 = vmul.f32 %v901, %v961
    %v969 = vmul.f32 %v902, %v961
    %v970 = vmul.f32 %v903, %v961
    %v971 = vmul.f32 %v904, %v961
    %v972 = vmul.f32 %v905, %v961
    %v973 = vmul.f32 %v906, %v961
    %v974 = vmul.f32 %v907, %v961
    %v975 = vmul.f32 %v908, %v961
    %v976 = vmul.f32 %v909, %v961
    %v977 = vmul.f32 %v910, %v961
    %v978 = vmul.f32 %v911, %v961
    %v979 = vmul.f32 %v912, %v961
    %v980 = vmul.f32 %v913, %v961
    %v981 = vmul.f32 %v914, %v961
    %v982 = vmul.f32 %v915, %v961
    %v983 = vmul.f32 %v916, %v961
    %v984 = vmul.f32 %v917, %v961
    %v985 = vmul.f32 %v918, %v961
    %v986 = vmul.f32 %v919, %v961
    %v987 = vmul.f32 %v920, %v961
    %v988 = vmul.f32 %v921, %v961
    %v989 = vmul.f32 %v922, %v961
    %v990 = vmul.f32 %v923, %v961
    %v991 = vmul.f32 %v924, %v961
    %v992 = vmul.f32 %v925, %v961
    %v993 = vmul.f32 %v926, %v961
    %v994 = vmul.f32 %v927, %v961
    %v995 = vmul.f32 %v928, %v961
    %v996 = vmul.f32 %v929, %v961
    %v997 = vmul.f32 %v930, %v961
    %v998 = vmul.f32 %v931, %v961
    %v999 = vmul.f32 %v932, %v961
    %v1000 = vmul.f32 %v933, %v961
    %v1001 = vmul.f32 %v934, %v961
    %v1002 = vmul.f32 %v935, %v961
    %v1003 = vmul.f32 %v936, %v961
    %v1004 = vmul.f32 %v937, %v961
    %v1005 = vmul.f32 %v938, %v961
    %v1006 = vmul.f32 %v939, %v961
    %v1007 = vmul.f32 %v940, %v961
    %v1008 = vmul.f32 %v941, %v961
    %v1009 = vmul.f32 %v942, %v961
    %v1010 = vmul.f32 %v943, %v961
    %v1011 = vmul.f32 %v944, %v961
    %v1012 = vmul.f32 %v945, %v961
    %v1013 = vmul.f32 %v946, %v961
    %v1014 = vmul.f32 %v947, %v961
    %v1015 = vmul.f32 %v948, %v961
    %v1016 = vmul.f32 %v949, %v961
    %v1017 = vmul.f32 %v950, %v961
    %v1018 = vmul.f32 %v951, %v961
    %v1019 = vmul.f32 %v952, %v961
    %v1020 = vmul.f32 %v953, %v961
    %v1021 = vmul.f32 %v954, %v961
    %v1022 = vmul.f32 %v955, %v961
    %v1023 = vld [vmem:[#allocation8] sm:$0x1]
    %v1025 = vlaneseq
    %v1026 = vshrl.u32 %v1025, 7
    %v1027 = vsub.s32 0, %v1026
    %v1028 = vrot.slane %v1023, %v1027
    %v1030 = vadd.f32 %v963, %v1028
    %v1031 = vadd.f32 %v964, %v1028
    %v1032 = vadd.f32 %v965, %v1028
    %v1033 = vadd.f32 %v966, %v1028
    %v1034 = vadd.f32 %v967, %v1028
    %v1035 = vadd.f32 %v968, %v1028
    %v1036 = vadd.f32 %v969, %v1028
    %v1037 = vadd.f32 %v970, %v1028
    %v1038 = vadd.f32 %v971, %v1028
    %v1039 = vadd.f32 %v972, %v1028
    %v1040 = vadd.f32 %v973, %v1028
    %v1041 = vadd.f32 %v974, %v1028
    %v1042 = vadd.f32 %v975, %v1028
    %v1043 = vadd.f32 %v976, %v1028
    %v1044 = vadd.f32 %v977, %v1028
    %v1045 = vadd.f32 %v978, %v1028
    %v1046 = vadd.f32 %v979, %v1028
    %v1047 = vadd.f32 %v980, %v1028
    %v1048 = vadd.f32 %v981, %v1028
    %v1049 = vadd.f32 %v982, %v1028
    %v1050 = vadd.f32 %v983, %v1028
    %v1051 = vadd.f32 %v984, %v1028
    %v1052 = vadd.f32 %v985, %v1028
    %v1053 = vadd.f32 %v986, %v1028
    %v1054 = vadd.f32 %v987, %v1028
    %v1055 = vadd.f32 %v988, %v1028
    %v1056 = vadd.f32 %v989, %v1028
    %v1057 = vadd.f32 %v990, %v1028
    %v1058 = vadd.f32 %v991, %v1028
    %v1059 = vadd.f32 %v992, %v1028
    %v1060 = vadd.f32 %v993, %v1028
    %v1061 = vadd.f32 %v994, %v1028
    %v1062 = vadd.f32 %v995, %v1028
    %v1063 = vadd.f32 %v996, %v1028
    %v1064 = vadd.f32 %v997, %v1028
    %v1065 = vadd.f32 %v998, %v1028
    %v1066 = vadd.f32 %v999, %v1028
    %v1067 = vadd.f32 %v1000, %v1028
    %v1068 = vadd.f32 %v1001, %v1028
    %v1069 = vadd.f32 %v1002, %v1028
    %v1070 = vadd.f32 %v1003, %v1028
    %v1071 = vadd.f32 %v1004, %v1028
    %v1072 = vadd.f32 %v1005, %v1028
    %v1073 = vadd.f32 %v1006, %v1028
    %v1074 = vadd.f32 %v1007, %v1028
    %v1075 = vadd.f32 %v1008, %v1028
    %v1076 = vadd.f32 %v1009, %v1028
    %v1077 = vadd.f32 %v1010, %v1028
    %v1078 = vadd.f32 %v1011, %v1028
    %v1079 = vadd.f32 %v1012, %v1028
    %v1080 = vadd.f32 %v1013, %v1028
    %v1081 = vadd.f32 %v1014, %v1028
    %v1082 = vadd.f32 %v1015, %v1028
    %v1083 = vadd.f32 %v1016, %v1028
    %v1084 = vadd.f32 %v1017, %v1028
    %v1085 = vadd.f32 %v1018, %v1028
    %v1086 = vadd.f32 %v1019, %v1028
    %v1087 = vadd.f32 %v1020, %v1028
    %v1088 = vadd.f32 %v1021, %v1028
    %v1089 = vadd.f32 %v1022, %v1028
    %v1090 = vmax.f32 %v1030, 0.0
    %v1091 = vmax.f32 %v1031, 0.0
    %v1092 = vmax.f32 %v1032, 0.0
    %v1093 = vmax.f32 %v1033, 0.0
    %v1094 = vmax.f32 %v1034, 0.0
    %v1095 = vmax.f32 %v1035, 0.0
    %v1096 = vmax.f32 %v1036, 0.0
    %v1097 = vmax.f32 %v1037, 0.0
    %v1098 = vmax.f32 %v1038, 0.0
    %v1099 = vmax.f32 %v1039, 0.0
    %v1100 = vmax.f32 %v1040, 0.0
    %v1101 = vmax.f32 %v1041, 0.0
    %v1102 = vmax.f32 %v1042, 0.0
    %v1103 = vmax.f32 %v1043, 0.0
    %v1104 = vmax.f32 %v1044, 0.0
    %v1105 = vmax.f32 %v1045, 0.0
    %v1106 = vmax.f32 %v1046, 0.0
    %v1107 = vmax.f32 %v1047, 0.0
    %v1108 = vmax.f32 %v1048, 0.0
    %v1109 = vmax.f32 %v1049, 0.0
    %v1110 = vmax.f32 %v1050, 0.0
    %v1111 = vmax.f32 %v1051, 0.0
    %v1112 = vmax.f32 %v1052, 0.0
    %v1113 = vmax.f32 %v1053, 0.0
    %v1114 = vmax.f32 %v1054, 0.0
    %v1115 = vmax.f32 %v1055, 0.0
    %v1116 = vmax.f32 %v1056, 0.0
    %v1117 = vmax.f32 %v1057, 0.0
    %v1118 = vmax.f32 %v1058, 0.0
    %v1119 = vmax.f32 %v1059, 0.0
    %v1120 = vmax.f32 %v1060, 0.0
    %v1121 = vmax.f32 %v1061, 0.0
    %v1122 = vmax.f32 %v1062, 0.0
    %v1123 = vmax.f32 %v1063, 0.0
    %v1124 = vmax.f32 %v1064, 0.0
    %v1125 = vmax.f32 %v1065, 0.0
    %v1126 = vmax.f32 %v1066, 0.0
    %v1127 = vmax.f32 %v1067, 0.0
    %v1128 = vmax.f32 %v1068, 0.0
    %v1129 = vmax.f32 %v1069, 0.0
    %v1130 = vmax.f32 %v1070, 0.0
    %v1131 = vmax.f32 %v1071, 0.0
    %v1132 = vmax.f32 %v1072, 0.0
    %v1133 = vmax.f32 %v1073, 0.0
    %v1134 = vmax.f32 %v1074, 0.0
    %v1135 = vmax.f32 %v1075, 0.0
    %v1136 = vmax.f32 %v1076, 0.0
    %v1137 = vmax.f32 %v1077, 0.0
    %v1138 = vmax.f32 %v1078, 0.0
    %v1139 = vmax.f32 %v1079, 0.0
    %v1140 = vmax.f32 %v1080, 0.0
    %v1141 = vmax.f32 %v1081, 0.0
    %v1142 = vmax.f32 %v1082, 0.0
    %v1143 = vmax.f32 %v1083, 0.0
    %v1144 = vmax.f32 %v1084, 0.0
    %v1145 = vmax.f32 %v1085, 0.0
    %v1146 = vmax.f32 %v1086, 0.0
    %v1147 = vmax.f32 %v1087, 0.0
    %v1148 = vmax.f32 %v1088, 0.0
    %v1149 = vmax.f32 %v1089, 0.0
    %v1150 = vmax.f32 %v1090, %v1092
    %v1151 = vmax.f32 %v1091, %v1093
    %v1152 = vmax.f32 %v1094, %v1096
    %v1153 = vmax.f32 %v1095, %v1097
    %v1154 = vmax.f32 %v1098, %v1100
    %v1155 = vmax.f32 %v1099, %v1101
    %v1156 = vmax.f32 %v1102, %v1104
    %v1157 = vmax.f32 %v1103, %v1105
    %v1158 = vmax.f32 %v1106, %v1108
    %v1159 = vmax.f32 %v1107, %v1109
    %v1160 = vmax.f32 %v1110, %v1112
    %v1161 = vmax.f32 %v1111, %v1113
    %v1162 = vmax.f32 %v1114, %v1116
    %v1163 = vmax.f32 %v1115, %v1117
    %v1164 = vmax.f32 %v1118, %v1120
    %v1165 = vmax.f32 %v1119, %v1121
    %v1166 = vmax.f32 %v1122, %v1124
    %v1167 = vmax.f32 %v1123, %v1125
    %v1168 = vmax.f32 %v1126, %v1128
    %v1169 = vmax.f32 %v1127, %v1129
    %v1170 = vmax.f32 %v1130, %v1132
    %v1171 = vmax.f32 %v1131, %v1133
    %v1172 = vmax.f32 %v1134, %v1136
    %v1173 = vmax.f32 %v1135, %v1137
    %v1174 = vmax.f32 %v1138, %v1140
    %v1175 = vmax.f32 %v1139, %v1141
    %v1176 = vmax.f32 %v1142, %v1144
    %v1177 = vmax.f32 %v1143, %v1145
    %v1178 = vmax.f32 %v1146, %v1148
    %v1179 = vmax.f32 %v1147, %v1149
    %1206 = vrot.lane.b32.xlu0 %v1152, 32
    %v1207 = vpop.permute.xlu0 %1206
    %1208 = vrot.lane.b32.xlu0 %v1153, 32
    %v1209 = vpop.permute.xlu0 %1208
    %1210 = vrot.lane.b32.xlu0 %v1154, 32
    %v1211 = vpop.permute.xlu0 %1210
    %1212 = vrot.lane.b32.xlu0 %v1155, 32
    %v1213 = vpop.permute.xlu0 %1212
    %1214 = vrot.lane.b32.xlu0 %v1156, 32
    %v1215 = vpop.permute.xlu0 %1214
    %1216 = vrot.lane.b32.xlu0 %v1157, 32
    %v1217 = vpop.permute.xlu0 %1216
    %1218 = vrot.lane.b32.xlu0 %v1158, 32
    %v1219 = vpop.permute.xlu0 %1218
    %1220 = vrot.lane.b32.xlu0 %v1159, 32
    %v1221 = vpop.permute.xlu0 %1220
    %1222 = vrot.lane.b32.xlu0 %v1160, 32
    %v1223 = vpop.permute.xlu0 %1222
    %1224 = vrot.lane.b32.xlu0 %v1161, 32
    %v1225 = vpop.permute.xlu0 %1224
    %1226 = vrot.lane.b32.xlu0 %v1162, 32
    %v1227 = vpop.permute.xlu0 %1226
    %1228 = vrot.lane.b32.xlu0 %v1163, 32
    %v1229 = vpop.permute.xlu0 %1228
    %1230 = vrot.lane.b32.xlu0 %v1164, 32
    %v1231 = vpop.permute.xlu0 %1230
    %1232 = vrot.lane.b32.xlu0 %v1165, 32
    %v1233 = vpop.permute.xlu0 %1232
    %1234 = vrot.lane.b32.xlu0 %v1166, 32
    %v1235 = vpop.permute.xlu0 %1234
    %1236 = vrot.lane.b32.xlu0 %v1167, 32
    %v1237 = vpop.permute.xlu0 %1236
    %1238 = vrot.lane.b32.xlu0 %v1168, 32
    %v1239 = vpop.permute.xlu0 %1238
    %1240 = vrot.lane.b32.xlu0 %v1169, 32
    %v1241 = vpop.permute.xlu0 %1240
    %1242 = vrot.lane.b32.xlu0 %v1170, 32
    %v1243 = vpop.permute.xlu0 %1242
    %1244 = vrot.lane.b32.xlu0 %v1171, 32
    %v1245 = vpop.permute.xlu0 %1244
    %1246 = vrot.lane.b32.xlu0 %v1172, 32
    %v1247 = vpop.permute.xlu0 %1246
    %1248 = vrot.lane.b32.xlu0 %v1173, 32
    %v1249 = vpop.permute.xlu0 %1248
    %1250 = vrot.lane.b32.xlu0 %v1174, 32
    %v1251 = vpop.permute.xlu0 %1250
    %1252 = vrot.lane.b32.xlu0 %v1175, 32
    %v1253 = vpop.permute.xlu0 %1252
    %1254 = vrot.lane.b32.xlu0 %v1176, 32
    %v1255 = vpop.permute.xlu0 %1254
    %1256 = vrot.lane.b32.xlu0 %v1177, 32
    %v1257 = vpop.permute.xlu0 %1256
    %1286 = vrot.lane.b32.xlu0 %v1154, 64
    %v1287 = vpop.permute.xlu0 %1286
    %1288 = vrot.lane.b32.xlu0 %v1155, 64
    %v1289 = vpop.permute.xlu0 %1288
    %1290 = vrot.lane.b32.xlu0 %v1156, 64
    %v1291 = vpop.permute.xlu0 %1290
    %1292 = vrot.lane.b32.xlu0 %v1157, 64
    %v1293 = vpop.permute.xlu0 %1292
    %1294 = vrot.lane.b32.xlu0 %v1158, 64
    %v1295 = vpop.permute.xlu0 %1294
    %1296 = vrot.lane.b32.xlu0 %v1159, 64
    %v1297 = vpop.permute.xlu0 %1296
    %1298 = vrot.lane.b32.xlu0 %v1160, 64
    %v1299 = vpop.permute.xlu0 %1298
    %1300 = vrot.lane.b32.xlu0 %v1161, 64
    %v1301 = vpop.permute.xlu0 %1300
    %1302 = vrot.lane.b32.xlu0 %v1162, 64
    %v1303 = vpop.permute.xlu0 %1302
    %1304 = vrot.lane.b32.xlu0 %v1163, 64
    %v1305 = vpop.permute.xlu0 %1304
    %1306 = vrot.lane.b32.xlu0 %v1164, 64
    %v1307 = vpop.permute.xlu0 %1306
    %1308 = vrot.lane.b32.xlu0 %v1165, 64
    %v1309 = vpop.permute.xlu0 %1308
    %1310 = vrot.lane.b32.xlu0 %v1166, 64
    %v1311 = vpop.permute.xlu0 %1310
    %1312 = vrot.lane.b32.xlu0 %v1167, 64
    %v1313 = vpop.permute.xlu0 %1312
    %1314 = vrot.lane.b32.xlu0 %v1168, 64
    %v1315 = vpop.permute.xlu0 %1314
    %1316 = vrot.lane.b32.xlu0 %v1169, 64
    %v1317 = vpop.permute.xlu0 %1316
    %1318 = vrot.lane.b32.xlu0 %v1170, 64
    %v1319 = vpop.permute.xlu0 %1318
    %1320 = vrot.lane.b32.xlu0 %v1171, 64
    %v1321 = vpop.permute.xlu0 %1320
    %1322 = vrot.lane.b32.xlu0 %v1172, 64
    %v1323 = vpop.permute.xlu0 %1322
    %1324 = vrot.lane.b32.xlu0 %v1173, 64
    %v1325 = vpop.permute.xlu0 %1324
    %1326 = vrot.lane.b32.xlu0 %v1174, 64
    %v1327 = vpop.permute.xlu0 %1326
    %1328 = vrot.lane.b32.xlu0 %v1175, 64
    %v1329 = vpop.permute.xlu0 %1328
    %1330 = vrot.lane.b32.xlu0 %v1176, 64
    %v1331 = vpop.permute.xlu0 %1330
    %1332 = vrot.lane.b32.xlu0 %v1177, 64
    %v1333 = vpop.permute.xlu0 %1332
    %1334 = vrot.lane.b32.xlu0 %v1178, 64
    %v1335 = vpop.permute.xlu0 %1334
    %1336 = vrot.lane.b32.xlu0 %v1179, 64
    %v1337 = vpop.permute.xlu0 %1336
    %vm1364 = vcmask 261120
    %v1365 = vsel %vm1364, %v1150, %v1207
    %v1366 = vsel %vm1364, %v1151, %v1209
    %v1367 = vsel %vm1364, %v1152, %v1211
    %v1368 = vsel %vm1364, %v1153, %v1213
    %v1369 = vsel %vm1364, %v1154, %v1215
    %v1370 = vsel %vm1364, %v1155, %v1217
    %v1371 = vsel %vm1364, %v1156, %v1219
    %v1372 = vsel %vm1364, %v1157, %v1221
    %v1373 = vsel %vm1364, %v1158, %v1223
    %v1374 = vsel %vm1364, %v1159, %v1225
    %v1375 = vsel %vm1364, %v1160, %v1227
    %v1376 = vsel %vm1364, %v1161, %v1229
    %v1377 = vsel %vm1364, %v1162, %v1231
    %v1378 = vsel %vm1364, %v1163, %v1233
    %v1379 = vsel %vm1364, %v1164, %v1235
    %v1380 = vsel %vm1364, %v1165, %v1237
    %v1381 = vsel %vm1364, %v1166, %v1239
    %v1382 = vsel %vm1364, %v1167, %v1241
    %v1383 = vsel %vm1364, %v1168, %v1243
    %v1384 = vsel %vm1364, %v1169, %v1245
    %v1385 = vsel %vm1364, %v1170, %v1247
    %v1386 = vsel %vm1364, %v1171, %v1249
    %v1387 = vsel %vm1364, %v1172, %v1251
    %v1388 = vsel %vm1364, %v1173, %v1253
    %v1389 = vsel %vm1364, %v1174, %v1255
    %v1390 = vsel %vm1364, %v1175, %v1257
    %vm1391 = vcmask 523264
    %v1392 = vsel %vm1391, %v1365, %v1287
    %v1393 = vsel %vm1391, %v1366, %v1289
    %v1394 = vsel %vm1391, %v1367, %v1291
    %v1395 = vsel %vm1391, %v1368, %v1293
    %v1396 = vsel %vm1391, %v1369, %v1295
    %v1397 = vsel %vm1391, %v1370, %v1297
    %v1398 = vsel %vm1391, %v1371, %v1299
    %v1399 = vsel %vm1391, %v1372, %v1301
    %v1400 = vsel %vm1391, %v1373, %v1303
    %v1401 = vsel %vm1391, %v1374, %v1305
    %v1402 = vsel %vm1391, %v1375, %v1307
    %v1403 = vsel %vm1391, %v1376, %v1309
    %v1404 = vsel %vm1391, %v1377, %v1311
    %v1405 = vsel %vm1391, %v1378, %v1313
    %v1406 = vsel %vm1391, %v1379, %v1315
    %v1407 = vsel %vm1391, %v1380, %v1317
    %v1408 = vsel %vm1391, %v1381, %v1319
    %v1409 = vsel %vm1391, %v1382, %v1321
    %v1410 = vsel %vm1391, %v1383, %v1323
    %v1411 = vsel %vm1391, %v1384, %v1325
    %v1412 = vsel %vm1391, %v1385, %v1327
    %v1413 = vsel %vm1391, %v1386, %v1329
    %v1414 = vsel %vm1391, %v1387, %v1331
    %v1415 = vsel %vm1391, %v1388, %v1333
    %v1416 = vsel %vm1391, %v1389, %v1335
    %v1417 = vsel %vm1391, %v1390, %v1337
    %v1418 = vld [vmem:[#allocation10] sm:$0xff]
    %v1419 = vld [vmem:[#allocation10 + $0x8] sm:$0xff]
    %v1420 = vld [vmem:[#allocation10 + $0x10] sm:$0xff]
    %v1421 = vld [vmem:[#allocation10 + $0x18] sm:$0xff]
    %v1422 = vld [vmem:[#allocation10 + $0x20] sm:$0xff]
    %v1423 = vld [vmem:[#allocation10 + $0x28] sm:$0xff]
    %v1424 = vld [vmem:[#allocation10 + $0x30] sm:$0xff]
    %v1425 = vld [vmem:[#allocation10 + $0x38] sm:$0xff]
    %v1426 = vld [vmem:[#allocation10 + $0x40] sm:$0xff]
    %v1427 = vld [vmem:[#allocation10 + $0x48] sm:$0xff]
    %v1428 = vld [vmem:[#allocation10 + $0x50] sm:$0xff]
    %v1429 = vld [vmem:[#allocation10 + $0x58] sm:$0xff]
    %vm1430 = vcmask 785408
    %v1432 = vsel %vm1430, %v1392, 0
    %v1435 = vsel %vm1430, %v1393, 0
    %v1438 = vsel %vm1430, %v1394, 0
    %v1441 = vsel %vm1430, %v1395, 0
    %v1444 = vsel %vm1430, %v1396, 0
    %v1447 = vsel %vm1430, %v1397, 0
    %v1450 = vsel %vm1430, %v1398, 0
    %v1453 = vsel %vm1430, %v1399, 0
    %v1456 = vsel %vm1430, %v1400, 0
    %v1459 = vsel %vm1430, %v1401, 0
    %v1462 = vsel %vm1430, %v1402, 0
    %v1465 = vsel %vm1430, %v1403, 0
    %v1468 = vsel %vm1430, %v1404, 0
    %v1471 = vsel %vm1430, %v1405, 0
    %v1474 = vsel %vm1430, %v1406, 0
    %v1477 = vsel %vm1430, %v1407, 0
    %v1480 = vsel %vm1430, %v1408, 0
    %v1483 = vsel %vm1430, %v1409, 0
    %v1486 = vsel %vm1430, %v1410, 0
    %v1489 = vsel %vm1430, %v1411, 0
    %v1492 = vsel %vm1430, %v1412, 0
    %v1495 = vsel %vm1430, %v1413, 0
    %v1498 = vsel %vm1430, %v1414, 0
    %v1501 = vsel %vm1430, %v1415, 0
    %v1504 = vsel %vm1430, %v1416, 0
    %v1507 = vsel %vm1430, %v1417, 0
    %1509 = vmatprep.subr.mxu0 0.0
    %1510 = vmatpush1.msra.mxu0 %v1418
    %1511 = vmatprep.subr.mxu0 0.0
    %1512 = vmatpush1.msra.mxu0 %v1419
    %1513 = vmatprep.subr.mxu0 0.0
    %1514 = vmatpush1.msra.mxu0 %v1420
    %1515 = vmatprep.subr.mxu0 0.0
    %1516 = vmatpush1.msra.mxu0 %v1421
    %1517 = vmatprep.subr.mxu0 0.0
    %1518 = vmatpush1.msra.mxu0 %v1422
    %1519 = vmatprep.subr.mxu0 0.0
    %1520 = vmatpush1.msra.mxu0 %v1423
    %1521 = vmatprep.subr.mxu0 0.0
    %1522 = vmatpush1.msra.mxu0 %v1424
    %1523 = vmatprep.subr.mxu0 0.0
    %1524 = vmatpush1.msra.mxu0 %v1425
    %1525 = vmatprep.subr.mxu0 0.0
    %1526 = vmatpush1.msra.mxu0 %v1426
    %1527 = vmatprep.subr.mxu0 0.0
    %1528 = vmatpush1.msra.mxu0 %v1427
    %1529 = vmatprep.subr.mxu0 0.0
    %1530 = vmatpush1.msra.mxu0 %v1428
    %1531 = vmatprep.subr.mxu0 0.0
    %1532 = vmatpush1.msra.mxu0 %v1429
    %1533 = vmatprep.subr.mxu0 0.0
    %1534 = vmatpush1.msra.mxu0 0.0
    %1535 = vmatprep.subr.mxu0 0.0
    %1536 = vmatpush1.msra.mxu0 0.0
    %1537 = vmatprep.subr.mxu0 0.0
    %1538 = vmatpush1.msra.mxu0 0.0
    %1539 = vmatprep.subr.mxu0 0.0
    %1540 = vmatpush1.msra.mxu0 0.0
    %1541 = vmatprep.subr.mxu0 0.0
    %1542 = vmatpush1.msra.mxu0 0.0
    %1543 = vmatprep.subr.mxu0 0.0
    %1544 = vmatpush1.msra.mxu0 0.0
    %1545 = vmatprep.subr.mxu0 0.0
    %1546 = vmatpush1.msra.mxu0 0.0
    %1547 = vmatprep.subr.mxu0 0.0
    %1548 = vmatpush1.msra.mxu0 0.0
    %1549 = vmatprep.subr.mxu0 0.0
    %1550 = vmatpush1.msra.mxu0 0.0
    %1551 = vmatprep.subr.mxu0 0.0
    %1552 = vmatpush1.msra.mxu0 0.0
    %1553 = vmatprep.subr.mxu0 0.0
    %1554 = vmatpush1.msra.mxu0 0.0
    %1555 = vmatprep.subr.mxu0 0.0
    %1556 = vmatpush1.msra.mxu0 0.0
    %1557 = vmatprep.subr.mxu0 0.0
    %1558 = vmatpush1.msra.mxu0 0.0
    %1559 = vmatprep.subr.mxu0 0.0
    %1560 = vmatpush1.msra.mxu0 0.0
    %1561 = vmatprep.subr.mxu0 0.0
    %1562 = vmatpush1.msra.mxu0 0.0
    %1563 = vmatprep.subr.mxu0 0.0
    %1564 = vmatpush1.msra.mxu0 0.0
    %1565 = vmatprep.subr.mxu0 0.0
    %1566 = vmatpush1.msra.mxu0 0.0
    %1567 = vmatprep.subr.mxu0 0.0
    %1568 = vmatpush1.msra.mxu0 0.0
    %1569 = vmatprep.subr.mxu0 0.0
    %1570 = vmatpush1.msra.mxu0 0.0
    %1571 = vmatprep.subr.mxu0 0.0
    %1572 = vmatpush1.msra.mxu0 0.0
    %1573 = vmatprep.mubr.f32.mxu0 0.0
    %1574 = vmatmul.mubr.f32.gmra.mrb[0].mxu0 %v1432
    %v1575 = vpop.f32.mrb[0].mxu0
    %v1576 = vadd.f32 0.0, %v1575
    %v1577 = vpop.f32.mrb[0].mxu0
    %1578 = vmatprep.mubr.f32.mxu0 0.0
    %1579 = vmatmul.mubr.f32.gmra.mrb[0].mxu0 %v1435
    %v1580 = vpop.f32.mrb[0].mxu0
    %v1581 = vadd.f32 0.0, %v1580
    %v1582 = vpop.f32.mrb[0].mxu0
    %1583 = vmatprep.mubr.f32.mxu0 0.0
    %1584 = vmatmul.mubr.f32.gmra.mrb[0].mxu0 %v1438
    %v1585 = vpop.f32.mrb[0].mxu0
    %v1586 = vadd.f32 0.0, %v1585
    %v1587 = vpop.f32.mrb[0].mxu0
    %1588 = vmatprep.mubr.f32.mxu0 0.0
    %1589 = vmatmul.mubr.f32.gmra.mrb[0].mxu0 %v1441
    %v1590 = vpop.f32.mrb[0].mxu0
    %v1591 = vadd.f32 0.0, %v1590
    %v1592 = vpop.f32.mrb[0].mxu0
    %1593 = vmatprep.mubr.f32.mxu0 0.0
    %1594 = vmatmul.mubr.f32.gmra.mrb[0].mxu0 %v1444
    %v1595 = vpop.f32.mrb[0].mxu0
    %v1596 = vadd.f32 0.0, %v1595
    %v1597 = vpop.f32.mrb[0].mxu0
    %1598 = vmatprep.mubr.f32.mxu0 0.0
    %1599 = vmatmul.mubr.f32.gmra.mrb[0].mxu0 %v1447
    %v1600 = vpop.f32.mrb[0].mxu0
    %v1601 = vadd.f32 0.0, %v1600
    %v1602 = vpop.f32.mrb[0].mxu0
    %1603 = vmatprep.mubr.f32.mxu0 0.0
    %1604 = vmatmul.mubr.f32.gmra.mrb[0].mxu0 %v1450
    %v1605 = vpop.f32.mrb[0].mxu0
    %v1606 = vadd.f32 0.0, %v1605
    %v1607 = vpop.f32.mrb[0].mxu0
    %1608 = vmatprep.mubr.f32.mxu0 0.0
    %1609 = vmatmul.mubr.f32.gmra.mrb[0].mxu0 %v1453
    %v1610 = vpop.f32.mrb[0].mxu0
    %v1611 = vadd.f32 0.0, %v1610
    %v1612 = vpop.f32.mrb[0].mxu0
    %1613 = vmatprep.mubr.f32.mxu0 0.0
    %1614 = vmatmul.mubr.f32.gmra.mrb[0].mxu0 %v1456
    %v1615 = vpop.f32.mrb[0].mxu0
    %v1616 = vadd.f32 0.0, %v1615
    %v1617 = vpop.f32.mrb[0].mxu0
    %1618 = vmatprep.mubr.f32.mxu0 0.0
    %1619 = vmatmul.mubr.f32.gmra.mrb[0].mxu0 %v1459
    %v1620 = vpop.f32.mrb[0].mxu0
    %v1621 = vadd.f32 0.0, %v1620
    %v1622 = vpop.f32.mrb[0].mxu0
    %1623 = vmatprep.mubr.f32.mxu0 0.0
    %1624 = vmatmul.mubr.f32.gmra.mrb[0].mxu0 %v1462
    %v1625 = vpop.f32.mrb[0].mxu0
    %v1626 = vadd.f32 0.0, %v1625
    %v1627 = vpop.f32.mrb[0].mxu0
    %1628 = vmatprep.mubr.f32.mxu0 0.0
    %1629 = vmatmul.mubr.f32.gmra.mrb[0].mxu0 %v1465
    %v1630 = vpop.f32.mrb[0].mxu0
    %v1631 = vadd.f32 0.0, %v1630
    %v1632 = vpop.f32.mrb[0].mxu0
    %1633 = vmatprep.mubr.f32.mxu0 0.0
    %1634 = vmatmul.mubr.f32.gmra.mrb[0].mxu0 %v1468
    %v1635 = vpop.f32.mrb[0].mxu0
    %v1636 = vadd.f32 0.0, %v1635
    %v1637 = vpop.f32.mrb[0].mxu0
    %1638 = vmatprep.mubr.f32.mxu0 0.0
    %1639 = vmatmul.mubr.f32.gmra.mrb[0].mxu0 %v1471
    %v1640 = vpop.f32.mrb[0].mxu0
    %v1641 = vadd.f32 0.0, %v1640
    %v1642 = vpop.f32.mrb[0].mxu0
    %1643 = vmatprep.mubr.f32.mxu0 0.0
    %1644 = vmatmul.mubr.f32.gmra.mrb[0].mxu0 %v1474
    %v1645 = vpop.f32.mrb[0].mxu0
    %v1646 = vadd.f32 0.0, %v1645
    %v1647 = vpop.f32.mrb[0].mxu0
    %1648 = vmatprep.mubr.f32.mxu0 0.0
    %1649 = vmatmul.mubr.f32.gmra.mrb[0].mxu0 %v1477
    %v1650 = vpop.f32.mrb[0].mxu0
    %v1651 = vadd.f32 0.0, %v1650
    %v1652 = vpop.f32.mrb[0].mxu0
    %1653 = vmatprep.mubr.f32.mxu0 0.0
    %1654 = vmatmul.mubr.f32.gmra.mrb[0].mxu0 %v1480
    %v1655 = vpop.f32.mrb[0].mxu0
    %v1656 = vadd.f32 0.0, %v1655
    %v1657 = vpop.f32.mrb[0].mxu0
    %1658 = vmatprep.mubr.f32.mxu0 0.0
    %1659 = vmatmul.mubr.f32.gmra.mrb[0].mxu0 %v1483
    %v1660 = vpop.f32.mrb[0].mxu0
    %v1661 = vadd.f32 0.0, %v1660
    %v1662 = vpop.f32.mrb[0].mxu0
    %1663 = vmatprep.mubr.f32.mxu0 0.0
    %1664 = vmatmul.mubr.f32.gmra.mrb[0].mxu0 %v1486
    %v1665 = vpop.f32.mrb[0].mxu0
    %v1666 = vadd.f32 0.0, %v1665
    %v1667 = vpop.f32.mrb[0].mxu0
    %1668 = vmatprep.mubr.f32.mxu0 0.0
    %1669 = vmatmul.mubr.f32.gmra.mrb[0].mxu0 %v1489
    %v1670 = vpop.f32.mrb[0].mxu0
    %v1671 = vadd.f32 0.0, %v1670
    %v1672 = vpop.f32.mrb[0].mxu0
    %1673 = vmatprep.mubr.f32.mxu0 0.0
    %1674 = vmatmul.mubr.f32.gmra.mrb[0].mxu0 %v1492
    %v1675 = vpop.f32.mrb[0].mxu0
    %v1676 = vadd.f32 0.0, %v1675
    %v1677 = vpop.f32.mrb[0].mxu0
    %1678 = vmatprep.mubr.f32.mxu0 0.0
    %1679 = vmatmul.mubr.f32.gmra.mrb[0].mxu0 %v1495
    %v1680 = vpop.f32.mrb[0].mxu0
    %v1681 = vadd.f32 0.0, %v1680
    %v1682 = vpop.f32.mrb[0].mxu0
    %1683 = vmatprep.mubr.f32.mxu0 0.0
    %1684 = vmatmul.mubr.f32.gmra.mrb[0].mxu0 %v1498
    %v1685 = vpop.f32.mrb[0].mxu0
    %v1686 = vadd.f32 0.0, %v1685
    %v1687 = vpop.f32.mrb[0].mxu0
    %1688 = vmatprep.mubr.f32.mxu0 0.0
    %1689 = vmatmul.mubr.f32.gmra.mrb[0].mxu0 %v1501
    %v1690 = vpop.f32.mrb[0].mxu0
    %v1691 = vadd.f32 0.0, %v1690
    %v1692 = vpop.f32.mrb[0].mxu0
    %1693 = vmatprep.mubr.f32.mxu0 0.0
    %1694 = vmatmul.mubr.f32.gmra.mrb[0].mxu0 %v1504
    %v1695 = vpop.f32.mrb[0].mxu0
    %v1696 = vpop.f32.mrb[0].mxu0
    %1697 = vmatprep.mubr.f32.mxu0 0.0
    %1698 = vmatmul.mubr.f32.gmra.mrb[0].mxu0 %v1507
    %v1699 = vpop.f32.mrb[0].mxu0
    %v1700 = vpop.f32.mrb[0].mxu0
    %1701 = vdwg.mxu0
    %v1702 = vld [vmem:[#allocation11] sm:$0x1]
    %v1704 = vlaneseq
    %v1705 = vshrl.u32 %v1704, 7
    %v1706 = vsub.s32 0, %v1705
    %v1707 = vrot.slane %v1702, %v1706
    %v1709 = vmul.f32 %v1576, %v1707
    %v1710 = vmul.f32 %v1581, %v1707
    %v1711 = vmul.f32 %v1586, %v1707
    %v1712 = vmul.f32 %v1591, %v1707
    %v1713 = vmul.f32 %v1596, %v1707
    %v1714 = vmul.f32 %v1601, %v1707
    %v1715 = vmul.f32 %v1606, %v1707
    %v1716 = vmul.f32 %v1611, %v1707
    %v1717 = vmul.f32 %v1616, %v1707
    %v1718 = vmul.f32 %v1621, %v1707
    %v1719 = vmul.f32 %v1626, %v1707
    %v1720 = vmul.f32 %v1631, %v1707
    %v1721 = vmul.f32 %v1636, %v1707
    %v1722 = vmul.f32 %v1641, %v1707
    %v1723 = vmul.f32 %v1646, %v1707
    %v1724 = vmul.f32 %v1651, %v1707
    %v1725 = vmul.f32 %v1656, %v1707
    %v1726 = vmul.f32 %v1661, %v1707
    %v1727 = vmul.f32 %v1666, %v1707
    %v1728 = vmul.f32 %v1671, %v1707
    %v1729 = vmul.f32 %v1676, %v1707
    %v1730 = vmul.f32 %v1681, %v1707
    %v1731 = vmul.f32 %v1686, %v1707
    %v1732 = vmul.f32 %v1691, %v1707
    %v1733 = vld [vmem:[#allocation13] sm:$0x1]
    %v1735 = vlaneseq
    %v1736 = vshrl.u32 %v1735, 7
    %v1737 = vsub.s32 0, %v1736
    %v1738 = vrot.slane %v1733, %v1737
    %v1740 = vadd.f32 %v1709, %v1738
    %v1741 = vadd.f32 %v1710, %v1738
    %v1742 = vadd.f32 %v1711, %v1738
    %v1743 = vadd.f32 %v1712, %v1738
    %v1744 = vadd.f32 %v1713, %v1738
    %v1745 = vadd.f32 %v1714, %v1738
    %v1746 = vadd.f32 %v1715, %v1738
    %v1747 = vadd.f32 %v1716, %v1738
    %v1748 = vadd.f32 %v1717, %v1738
    %v1749 = vadd.f32 %v1718, %v1738
    %v1750 = vadd.f32 %v1719, %v1738
    %v1751 = vadd.f32 %v1720, %v1738
    %v1752 = vadd.f32 %v1721, %v1738
    %v1753 = vadd.f32 %v1722, %v1738
    %v1754 = vadd.f32 %v1723, %v1738
    %v1755 = vadd.f32 %v1724, %v1738
    %v1756 = vadd.f32 %v1725, %v1738
    %v1757 = vadd.f32 %v1726, %v1738
    %v1758 = vadd.f32 %v1727, %v1738
    %v1759 = vadd.f32 %v1728, %v1738
    %v1760 = vadd.f32 %v1729, %v1738
    %v1761 = vadd.f32 %v1730, %v1738
    %v1762 = vadd.f32 %v1731, %v1738
    %v1763 = vadd.f32 %v1732, %v1738
    %v1764 = vmax.f32 %v1740, 0.0
    %v1765 = vmax.f32 %v1741, 0.0
    %v1766 = vmax.f32 %v1742, 0.0
    %v1767 = vmax.f32 %v1743, 0.0
    %v1768 = vmax.f32 %v1744, 0.0
    %v1769 = vmax.f32 %v1745, 0.0
    %v1770 = vmax.f32 %v1746, 0.0
    %v1771 = vmax.f32 %v1747, 0.0
    %v1772 = vmax.f32 %v1748, 0.0
    %v1773 = vmax.f32 %v1749, 0.0
    %v1774 = vmax.f32 %v1750, 0.0
    %v1775 = vmax.f32 %v1751, 0.0
    %v1776 = vmax.f32 %v1752, 0.0
    %v1777 = vmax.f32 %v1753, 0.0
    %v1778 = vmax.f32 %v1754, 0.0
    %v1779 = vmax.f32 %v1755, 0.0
    %v1780 = vmax.f32 %v1756, 0.0
    %v1781 = vmax.f32 %v1757, 0.0
    %v1782 = vmax.f32 %v1758, 0.0
    %v1783 = vmax.f32 %v1759, 0.0
    %v1784 = vmax.f32 %v1760, 0.0
    %v1785 = vmax.f32 %v1761, 0.0
    %v1786 = vmax.f32 %v1762, 0.0
    %v1787 = vmax.f32 %v1763, 0.0
    %v1788 = vmax.f32 %v1764, %v1766
    %v1789 = vmax.f32 %v1765, %v1767
    %v1790 = vmax.f32 %v1768, %v1770
    %v1791 = vmax.f32 %v1769, %v1771
    %v1792 = vmax.f32 %v1772, %v1774
    %v1793 = vmax.f32 %v1773, %v1775
    %v1794 = vmax.f32 %v1776, %v1778
    %v1795 = vmax.f32 %v1777, %v1779
    %v1796 = vmax.f32 %v1780, %v1782
    %v1797 = vmax.f32 %v1781, %v1783
    %v1798 = vmax.f32 %v1784, %v1786
    %v1799 = vmax.f32 %v1785, %v1787
    %1808 = vrot.lane.b32.xlu0 %v1790, 64
    %v1809 = vpop.permute.xlu0 %1808
    %1810 = vrot.lane.b32.xlu0 %v1791, 64
    %v1811 = vpop.permute.xlu0 %1810
    %1812 = vrot.lane.b32.xlu0 %v1792, 64
    %v1813 = vpop.permute.xlu0 %1812
    %1814 = vrot.lane.b32.xlu0 %v1793, 64
    %v1815 = vpop.permute.xlu0 %1814
    %1816 = vrot.lane.b32.xlu0 %v1794, 64
    %v1817 = vpop.permute.xlu0 %1816
    %1818 = vrot.lane.b32.xlu0 %v1795, 64
    %v1819 = vpop.permute.xlu0 %1818
    %1820 = vrot.lane.b32.xlu0 %v1796, 64
    %v1821 = vpop.permute.xlu0 %1820
    %1822 = vrot.lane.b32.xlu0 %v1797, 64
    %v1823 = vpop.permute.xlu0 %1822
    %v1832 = vsel %vm1391, %v1788, %v1809
    %v1833 = vsel %vm1391, %v1789, %v1811
    %v1834 = vsel %vm1391, %v1790, %v1813
    %v1835 = vsel %vm1391, %v1791, %v1815
    %v1836 = vsel %vm1391, %v1792, %v1817
    %v1837 = vsel %vm1391, %v1793, %v1819
    %v1838 = vsel %vm1391, %v1794, %v1821
    %v1839 = vsel %vm1391, %v1795, %v1823
    %v1840 = vld [vmem:[#allocation14] sm:$0xff]
    %v1841 = vld [vmem:[#allocation14 + $0x8] sm:$0xff]
    %v1842 = vld [vmem:[#allocation14 + $0x10] sm:$0xff]
    %v1843 = vld [vmem:[#allocation14 + $0x18] sm:$0xff]
    %v1844 = vld [vmem:[#allocation14 + $0x20] sm:$0xff]
    %v1845 = vld [vmem:[#allocation14 + $0x28] sm:$0xff]
    %v1846 = vld [vmem:[#allocation14 + $0x30] sm:$0xff]
    %v1847 = vld [vmem:[#allocation14 + $0x38] sm:$0xff]
    %v1848 = vld [vmem:[#allocation14 + $0x40] sm:$0xff]
    %v1849 = vld [vmem:[#allocation14 + $0x48] sm:$0xff]
    %v1850 = vld [vmem:[#allocation14 + $0x50] sm:$0xff]
    %v1851 = vld [vmem:[#allocation14 + $0x58] sm:$0xff]
    %v1852 = vld [vmem:[#allocation14 + $0x60] sm:$0xff]
    %v1853 = vld [vmem:[#allocation14 + $0x68] sm:$0xff]
    %v1854 = vld [vmem:[#allocation14 + $0x70] sm:$0xff]
    %v1855 = vld [vmem:[#allocation14 + $0x78] sm:$0xff]
    %v1856 = vld [vmem:[#allocation14 + $0x80] sm:$0xff]
    %v1857 = vld [vmem:[#allocation14 + $0x88] sm:$0xff]
    %v1858 = vld [vmem:[#allocation14 + $0x90] sm:$0xff]
    %v1859 = vld [vmem:[#allocation14 + $0x98] sm:$0xff]
    %v1860 = vld [vmem:[#allocation14 + $0xa0] sm:$0xff]
    %v1861 = vld [vmem:[#allocation14 + $0xa8] sm:$0xff]
    %v1862 = vld [vmem:[#allocation14 + $0xb0] sm:$0xff]
    %v1863 = vld [vmem:[#allocation14 + $0xb8] sm:$0xff]
    %v1864 = vsel %vm1391, %v1792, 0
    %v1866 = vsel %vm1391, %v1793, 0
    %v1868 = vsel %vm1391, %v1794, 0
    %v1870 = vsel %vm1391, %v1795, 0
    %v1872 = vsel %vm1391, %v1796, 0
    %v1874 = vsel %vm1391, %v1797, 0
    %v1877 = vsel %vm1391, %v1798, 0
    %v1880 = vsel %vm1391, %v1799, 0
    %1882 = vmatprep.subr.mxu0 0.0
    %1883 = vmatpush1.msra.mxu0 %v1840
    %1884 = vmatprep.subr.mxu0 0.0
    %1885 = vmatpush1.msra.mxu0 %v1841
    %1886 = vmatprep.subr.mxu0 0.0
    %1887 = vmatpush1.msra.mxu0 %v1842
    %1888 = vmatprep.subr.mxu0 0.0
    %1889 = vmatpush1.msra.mxu0 %v1843
    %1890 = vmatprep.subr.mxu0 0.0
    %1891 = vmatpush1.msra.mxu0 %v1844
    %1892 = vmatprep.subr.mxu0 0.0
    %1893 = vmatpush1.msra.mxu0 %v1845
    %1894 = vmatprep.subr.mxu0 0.0
    %1895 = vmatpush1.msra.mxu0 %v1846
    %1896 = vmatprep.subr.mxu0 0.0
    %1897 = vmatpush1.msra.mxu0 %v1847
    %1898 = vmatprep.subr.mxu0 0.0
    %1899 = vmatpush1.msra.mxu0 %v1848
    %1900 = vmatprep.subr.mxu0 0.0
    %1901 = vmatpush1.msra.mxu0 %v1849
    %1902 = vmatprep.subr.mxu0 0.0
    %1903 = vmatpush1.msra.mxu0 %v1850
    %1904 = vmatprep.subr.mxu0 0.0
    %1905 = vmatpush1.msra.mxu0 %v1851
    %1906 = vmatprep.subr.mxu0 0.0
    %1907 = vmatpush1.msra.mxu0 %v1852
    %1908 = vmatprep.subr.mxu0 0.0
    %1909 = vmatpush1.msra.mxu0 %v1853
    %1910 = vmatprep.subr.mxu0 0.0
    %1911 = vmatpush1.msra.mxu0 %v1854
    %1912 = vmatprep.subr.mxu0 0.0
    %1913 = vmatpush1.msra.mxu0 %v1855
    %1914 = vmatprep.subr.mxu0 0.0
    %1915 = vmatpush1.msra.mxu0 %v1856
    %1916 = vmatprep.subr.mxu0 0.0
    %1917 = vmatpush1.msra.mxu0 %v1857
    %1918 = vmatprep.subr.mxu0 0.0
    %1919 = vmatpush1.msra.mxu0 %v1858
    %1920 = vmatprep.subr.mxu0 0.0
    %1921 = vmatpush1.msra.mxu0 %v1859
    %1922 = vmatprep.subr.mxu0 0.0
    %1923 = vmatpush1.msra.mxu0 %v1860
    %1924 = vmatprep.subr.mxu0 0.0
    %1925 = vmatpush1.msra.mxu0 %v1861
    %1926 = vmatprep.subr.mxu0 0.0
    %1927 = vmatpush1.msra.mxu0 %v1862
    %1928 = vmatprep.subr.mxu0 0.0
    %1929 = vmatpush1.msra.mxu0 %v1863
    %1930 = vmatprep.subr.mxu0 0.0
    %1931 = vmatpush1.msra.mxu0 0.0
    %1932 = vmatprep.subr.mxu0 0.0
    %1933 = vmatpush1.msra.mxu0 0.0
    %1934 = vmatprep.subr.mxu0 0.0
    %1935 = vmatpush1.msra.mxu0 0.0
    %1936 = vmatprep.subr.mxu0 0.0
    %1937 = vmatpush1.msra.mxu0 0.0
    %1938 = vmatprep.subr.mxu0 0.0
    %1939 = vmatpush1.msra.mxu0 0.0
    %1940 = vmatprep.subr.mxu0 0.0
    %1941 = vmatpush1.msra.mxu0 0.0
    %1942 = vmatprep.subr.mxu0 0.0
    %1943 = vmatpush1.msra.mxu0 0.0
    %1944 = vmatprep.subr.mxu0 0.0
    %1945 = vmatpush1.msra.mxu0 0.0
    %1946 = vmatprep.mubr.f32.mxu0 %v1864
    %1947 = vmatmul.mubr.f32.gmra.mrb[0].mxu0 %v1832
    %v1948 = vpop.f32.mrb[0].mxu0
    %v1949 = vadd.f32 0.0, %v1948
    %v1950 = vpop.f32.mrb[0].mxu0
    %1951 = vmatprep.mubr.f32.mxu0 %v1866
    %1952 = vmatmul.mubr.f32.gmra.mrb[0].mxu0 %v1833
    %v1953 = vpop.f32.mrb[0].mxu0
    %v1954 = vadd.f32 0.0, %v1953
    %v1955 = vpop.f32.mrb[0].mxu0
    %1956 = vmatprep.mubr.f32.mxu0 %v1868
    %1957 = vmatmul.mubr.f32.gmra.mrb[0].mxu0 %v1834
    %v1958 = vpop.f32.mrb[0].mxu0
    %v1959 = vadd.f32 0.0, %v1958
    %v1960 = vpop.f32.mrb[0].mxu0
    %1961 = vmatprep.mubr.f32.mxu0 %v1870
    %1962 = vmatmul.mubr.f32.gmra.mrb[0].mxu0 %v1835
    %v1963 = vpop.f32.mrb[0].mxu0
    %v1964 = vadd.f32 0.0, %v1963
    %v1965 = vpop.f32.mrb[0].mxu0
    %1966 = vmatprep.mubr.f32.mxu0 %v1872
    %1967 = vmatmul.mubr.f32.gmra.mrb[0].mxu0 %v1836
    %v1968 = vpop.f32.mrb[0].mxu0
    %v1969 = vadd.f32 0.0, %v1968
    %v1970 = vpop.f32.mrb[0].mxu0
    %1971 = vmatprep.mubr.f32.mxu0 %v1874
    %1972 = vmatmul.mubr.f32.gmra.mrb[0].mxu0 %v1837
    %v1973 = vpop.f32.mrb[0].mxu0
    %v1974 = vadd.f32 0.0, %v1973
    %v1975 = vpop.f32.mrb[0].mxu0
    %1976 = vmatprep.mubr.f32.mxu0 %v1877
    %1977 = vmatmul.mubr.f32.gmra.mrb[0].mxu0 %v1838
    %v1978 = vpop.f32.mrb[0].mxu0
    %v1979 = vadd.f32 0.0, %v1978
    %v1980 = vpop.f32.mrb[0].mxu0
    %1981 = vmatprep.mubr.f32.mxu0 %v1880
    %1982 = vmatmul.mubr.f32.gmra.mrb[0].mxu0 %v1839
    %v1983 = vpop.f32.mrb[0].mxu0
    %v1984 = vadd.f32 0.0, %v1983
    %v1985 = vpop.f32.mrb[0].mxu0
    %1986 = vdwg.mxu0
    %v1987 = vld [vmem:[#allocation16] sm:$0x1]
    %v1989 = vlaneseq
    %v1990 = vshrl.u32 %v1989, 7
    %v1991 = vsub.s32 0, %v1990
    %v1992 = vrot.slane %v1987, %v1991
    %v1994 = vmul.f32 %v1949, %v1992
    %v1995 = vmul.f32 %v1954, %v1992
    %v1996 = vmul.f32 %v1959, %v1992
    %v1997 = vmul.f32 %v1964, %v1992
    %v1998 = vmul.f32 %v1969, %v1992
    %v1999 = vmul.f32 %v1974, %v1992
    %v2000 = vmul.f32 %v1979, %v1992
    %v2001 = vmul.f32 %v1984, %v1992
    %v2002 = vld [vmem:[#allocation17] sm:$0x1]
    %v2004 = vlaneseq
    %v2005 = vshrl.u32 %v2004, 7
    %v2006 = vsub.s32 0, %v2005
    %v2007 = vrot.slane %v2002, %v2006
    %v2009 = vadd.f32 %v1994, %v2007
    %v2010 = vadd.f32 %v1995, %v2007
    %v2011 = vadd.f32 %v1996, %v2007
    %v2012 = vadd.f32 %v1997, %v2007
    %v2013 = vadd.f32 %v1998, %v2007
    %v2014 = vadd.f32 %v1999, %v2007
    %v2015 = vadd.f32 %v2000, %v2007
    %v2016 = vadd.f32 %v2001, %v2007
    %v2017 = vmax.f32 %v2009, 0.0
    %v2018 = vmax.f32 %v2010, 0.0
    %v2019 = vmax.f32 %v2011, 0.0
    %v2020 = vmax.f32 %v2012, 0.0
    %v2021 = vmax.f32 %v2013, 0.0
    %v2022 = vmax.f32 %v2014, 0.0
    %v2023 = vmax.f32 %v2015, 0.0
    %v2024 = vmax.f32 %v2016, 0.0
    %v2025 = vmax.f32 %v2017, %v2019
    %v2026 = vmax.f32 %v2018, %v2020
    %v2027 = vmax.f32 %v2021, %v2023
    %v2028 = vmax.f32 %v2022, %v2024
    %v2029 = vld [vmem:[#allocation19] sm:$0xff]
    %v2030 = vld [vmem:[#allocation19 + $0x8] sm:$0xff]
    %v2031 = vld [vmem:[#allocation19 + $0x10] sm:$0xff]
    %v2032 = vld [vmem:[#allocation19 + $0x18] sm:$0xff]
    %v2033 = vld [vmem:[#allocation19 + $0x20] sm:$0xff]
    %v2034 = vld [vmem:[#allocation19 + $0x28] sm:$0xff]
    %v2035 = vld [vmem:[#allocation19 + $0x30] sm:$0xff]
    %v2036 = vld [vmem:[#allocation19 + $0x38] sm:$0xff]
    %v2037 = vld [vmem:[#allocation19 + $0x40] sm:$0xff]
    %v2038 = vld [vmem:[#allocation19 + $0x48] sm:$0xff]
    %v2039 = vld [vmem:[#allocation19 + $0x50] sm:$0xff]
    %v2040 = vld [vmem:[#allocation19 + $0x58] sm:$0xff]
    %v2041 = vld [vmem:[#allocation19 + $0x60] sm:$0xff]
    %v2042 = vld [vmem:[#allocation19 + $0x68] sm:$0xff]
    %v2043 = vld [vmem:[#allocation19 + $0x70] sm:$0xff]
    %v2044 = vld [vmem:[#allocation19 + $0x78] sm:$0xff]
    %v2045 = vld [vmem:[#allocation19 + $0x80] sm:$0xff]
    %v2046 = vld [vmem:[#allocation19 + $0x88] sm:$0xff]
    %v2047 = vld [vmem:[#allocation19 + $0x90] sm:$0xff]
    %v2048 = vld [vmem:[#allocation19 + $0x98] sm:$0xff]
    %v2049 = vld [vmem:[#allocation19 + $0xa0] sm:$0xff]
    %v2050 = vld [vmem:[#allocation19 + $0xa8] sm:$0xff]
    %v2051 = vld [vmem:[#allocation19 + $0xb0] sm:$0xff]
    %v2052 = vld [vmem:[#allocation19 + $0xb8] sm:$0xff]
    %v2053 = vld [vmem:[#allocation19 + $0xc0] sm:$0xff]
    %v2054 = vld [vmem:[#allocation19 + $0xc8] sm:$0xff]
    %v2055 = vld [vmem:[#allocation19 + $0xd0] sm:$0xff]
    %v2056 = vld [vmem:[#allocation19 + $0xd8] sm:$0xff]
    %v2057 = vld [vmem:[#allocation19 + $0xe0] sm:$0xff]
    %v2058 = vld [vmem:[#allocation19 + $0xe8] sm:$0xff]
    %v2059 = vld [vmem:[#allocation19 + $0xf0] sm:$0xff]
    %v2060 = vld [vmem:[#allocation19 + $0xf8] sm:$0xff]
    %v2061 = vld [vmem:[#allocation19 + $0x100] sm:$0xff]
    %v2062 = vld [vmem:[#allocation19 + $0x108] sm:$0xff]
    %v2063 = vld [vmem:[#allocation19 + $0x110] sm:$0xff]
    %v2064 = vld [vmem:[#allocation19 + $0x118] sm:$0xff]
    %v2065 = vld [vmem:[#allocation19 + $0x120] sm:$0xff]
    %v2066 = vld [vmem:[#allocation19 + $0x128] sm:$0xff]
    %v2067 = vld [vmem:[#allocation19 + $0x130] sm:$0xff]
    %v2068 = vld [vmem:[#allocation19 + $0x138] sm:$0xff]
    %v2069 = vld [vmem:[#allocation19 + $0x140] sm:$0xff]
    %v2070 = vld [vmem:[#allocation19 + $0x148] sm:$0xff]
    %v2071 = vld [vmem:[#allocation19 + $0x150] sm:$0xff]
    %v2072 = vld [vmem:[#allocation19 + $0x158] sm:$0xff]
    %v2073 = vld [vmem:[#allocation19 + $0x160] sm:$0xff]
    %v2074 = vld [vmem:[#allocation19 + $0x168] sm:$0xff]
    %v2075 = vld [vmem:[#allocation19 + $0x170] sm:$0xff]
    %v2076 = vld [vmem:[#allocation19 + $0x178] sm:$0xff]
    %v2077 = vld [vmem:[#allocation19 + $0x180] sm:$0xff]
    %v2078 = vld [vmem:[#allocation19 + $0x188] sm:$0xff]
    %v2079 = vld [vmem:[#allocation19 + $0x190] sm:$0xff]
    %v2080 = vld [vmem:[#allocation19 + $0x198] sm:$0xff]
    %v2081 = vld [vmem:[#allocation19 + $0x1a0] sm:$0xff]
    %v2082 = vld [vmem:[#allocation19 + $0x1a8] sm:$0xff]
    %v2083 = vld [vmem:[#allocation19 + $0x1b0] sm:$0xff]
    %v2084 = vld [vmem:[#allocation19 + $0x1b8] sm:$0xff]
    %v2085 = vld [vmem:[#allocation19 + $0x1c0] sm:$0xff]
    %v2086 = vld [vmem:[#allocation19 + $0x1c8] sm:$0xff]
    %v2087 = vld [vmem:[#allocation19 + $0x1d0] sm:$0xff]
    %v2088 = vld [vmem:[#allocation19 + $0x1d8] sm:$0xff]
    %v2089 = vld [vmem:[#allocation19 + $0x1e0] sm:$0xff]
    %v2090 = vld [vmem:[#allocation19 + $0x1e8] sm:$0xff]
    %v2091 = vld [vmem:[#allocation19 + $0x1f0] sm:$0xff]
    %v2092 = vld [vmem:[#allocation19 + $0x1f8] sm:$0xff]
    %v2093 = vld [vmem:[#allocation19 + $0x200] sm:$0xff]
    %v2094 = vld [vmem:[#allocation19 + $0x208] sm:$0xff]
    %v2095 = vld [vmem:[#allocation19 + $0x210] sm:$0xff]
    %v2096 = vld [vmem:[#allocation19 + $0x218] sm:$0xff]
    %v2097 = vld [vmem:[#allocation19 + $0x220] sm:$0xff]
    %v2098 = vld [vmem:[#allocation19 + $0x228] sm:$0xff]
    %v2099 = vld [vmem:[#allocation19 + $0x230] sm:$0xff]
    %v2100 = vld [vmem:[#allocation19 + $0x238] sm:$0xff]
    %v2101 = vld [vmem:[#allocation19 + $0x240] sm:$0xff]
    %v2102 = vld [vmem:[#allocation19 + $0x248] sm:$0xff]
    %v2103 = vld [vmem:[#allocation19 + $0x250] sm:$0xff]
    %v2104 = vld [vmem:[#allocation19 + $0x258] sm:$0xff]
    %v2105 = vld [vmem:[#allocation19 + $0x260] sm:$0xff]
    %v2106 = vld [vmem:[#allocation19 + $0x268] sm:$0xff]
    %v2107 = vld [vmem:[#allocation19 + $0x270] sm:$0xff]
    %v2108 = vld [vmem:[#allocation19 + $0x278] sm:$0xff]
    %v2109 = vld [vmem:[#allocation19 + $0x280] sm:$0xff]
    %v2110 = vld [vmem:[#allocation19 + $0x288] sm:$0xff]
    %v2111 = vld [vmem:[#allocation19 + $0x290] sm:$0xff]
    %v2112 = vld [vmem:[#allocation19 + $0x298] sm:$0xff]
    %v2113 = vld [vmem:[#allocation19 + $0x2a0] sm:$0xff]
    %v2114 = vld [vmem:[#allocation19 + $0x2a8] sm:$0xff]
    %v2115 = vld [vmem:[#allocation19 + $0x2b0] sm:$0xff]
    %v2116 = vld [vmem:[#allocation19 + $0x2b8] sm:$0xff]
    %v2117 = vld [vmem:[#allocation19 + $0x2c0] sm:$0xff]
    %v2118 = vld [vmem:[#allocation19 + $0x2c8] sm:$0xff]
    %v2119 = vld [vmem:[#allocation19 + $0x2d0] sm:$0xff]
    %v2120 = vld [vmem:[#allocation19 + $0x2d8] sm:$0xff]
    %v2121 = vld [vmem:[#allocation19 + $0x2e0] sm:$0xff]
    %v2122 = vld [vmem:[#allocation19 + $0x2e8] sm:$0xff]
    %v2123 = vld [vmem:[#allocation19 + $0x2f0] sm:$0xff]
    %v2124 = vld [vmem:[#allocation19 + $0x2f8] sm:$0xff]
    %v2125 = vld [vmem:[#allocation19 + $0x300] sm:$0xff]
    %v2126 = vld [vmem:[#allocation19 + $0x308] sm:$0xff]
    %v2127 = vld [vmem:[#allocation19 + $0x310] sm:$0xff]
    %v2128 = vld [vmem:[#allocation19 + $0x318] sm:$0xff]
    %v2129 = vld [vmem:[#allocation19 + $0x320] sm:$0xff]
    %v2130 = vld [vmem:[#allocation19 + $0x328] sm:$0xff]
    %v2131 = vld [vmem:[#allocation19 + $0x330] sm:$0xff]
    %v2132 = vld [vmem:[#allocation19 + $0x338] sm:$0xff]
    %v2133 = vld [vmem:[#allocation19 + $0x340] sm:$0xff]
    %v2134 = vld [vmem:[#allocation19 + $0x348] sm:$0xff]
    %v2135 = vld [vmem:[#allocation19 + $0x350] sm:$0xff]
    %v2136 = vld [vmem:[#allocation19 + $0x358] sm:$0xff]
    %v2137 = vld [vmem:[#allocation19 + $0x360] sm:$0xff]
    %v2138 = vld [vmem:[#allocation19 + $0x368] sm:$0xff]
    %v2139 = vld [vmem:[#allocation19 + $0x370] sm:$0xff]
    %v2140 = vld [vmem:[#allocation19 + $0x378] sm:$0xff]
    %v2141 = vld [vmem:[#allocation19 + $0x380] sm:$0xff]
    %v2142 = vld [vmem:[#allocation19 + $0x388] sm:$0xff]
    %v2143 = vld [vmem:[#allocation19 + $0x390] sm:$0xff]
    %v2144 = vld [vmem:[#allocation19 + $0x398] sm:$0xff]
    %v2145 = vld [vmem:[#allocation19 + $0x3a0] sm:$0xff]
    %v2146 = vld [vmem:[#allocation19 + $0x3a8] sm:$0xff]
    %v2147 = vld [vmem:[#allocation19 + $0x3b0] sm:$0xff]
    %v2148 = vld [vmem:[#allocation19 + $0x3b8] sm:$0xff]
    %v2149 = vld [vmem:[#allocation19 + $0x3c0] sm:$0xff]
    %v2150 = vld [vmem:[#allocation19 + $0x3c8] sm:$0xff]
    %v2151 = vld [vmem:[#allocation19 + $0x3d0] sm:$0xff]
    %v2152 = vld [vmem:[#allocation19 + $0x3d8] sm:$0xff]
    %v2153 = vld [vmem:[#allocation19 + $0x3e0] sm:$0xff]
    %v2154 = vld [vmem:[#allocation19 + $0x3e8] sm:$0xff]
    %v2155 = vld [vmem:[#allocation19 + $0x3f0] sm:$0xff]
    %v2156 = vld [vmem:[#allocation19 + $0x3f8] sm:$0xff]
    %2157 = vmatprep.subr.mxu0 %v2030
    %2158 = vmatpush1.msra.mxu0 %v2029
    %2159 = vmatprep.subr.mxu0 %v2034
    %2160 = vmatpush1.msra.mxu0 %v2033
    %2161 = vmatprep.subr.mxu0 %v2038
    %2162 = vmatpush1.msra.mxu0 %v2037
    %2163 = vmatprep.subr.mxu0 %v2042
    %2164 = vmatpush1.msra.mxu0 %v2041
    %2165 = vmatprep.subr.mxu0 %v2046
    %2166 = vmatpush1.msra.mxu0 %v2045
    %2167 = vmatprep.subr.mxu0 %v2050
    %2168 = vmatpush1.msra.mxu0 %v2049
    %2169 = vmatprep.subr.mxu0 %v2054
    %2170 = vmatpush1.msra.mxu0 %v2053
    %2171 = vmatprep.subr.mxu0 %v2058
    %2172 = vmatpush1.msra.mxu0 %v2057
    %2173 = vmatprep.subr.mxu0 %v2062
    %2174 = vmatpush1.msra.mxu0 %v2061
    %2175 = vmatprep.subr.mxu0 %v2066
    %2176 = vmatpush1.msra.mxu0 %v2065
    %2177 = vmatprep.subr.mxu0 %v2070
    %2178 = vmatpush1.msra.mxu0 %v2069
    %2179 = vmatprep.subr.mxu0 %v2074
    %2180 = vmatpush1.msra.mxu0 %v2073
    %2181 = vmatprep.subr.mxu0 %v2078
    %2182 = vmatpush1.msra.mxu0 %v2077
    %2183 = vmatprep.subr.mxu0 %v2082
    %2184 = vmatpush1.msra.mxu0 %v2081
    %2185 = vmatprep.subr.mxu0 %v2086
    %2186 = vmatpush1.msra.mxu0 %v2085
    %2187 = vmatprep.subr.mxu0 %v2090
    %2188 = vmatpush1.msra.mxu0 %v2089
    %2189 = vmatprep.subr.mxu0 0.0
    %2190 = vmatpush1.msra.mxu0 0.0
    %2191 = vmatprep.subr.mxu0 0.0
    %2192 = vmatpush1.msra.mxu0 0.0
    %2193 = vmatprep.subr.mxu0 0.0
    %2194 = vmatpush1.msra.mxu0 0.0
    %2195 = vmatprep.subr.mxu0 0.0
    %2196 = vmatpush1.msra.mxu0 0.0
    %2197 = vmatprep.subr.mxu0 0.0
    %2198 = vmatpush1.msra.mxu0 0.0
    %2199 = vmatprep.subr.mxu0 0.0
    %2200 = vmatpush1.msra.mxu0 0.0
    %2201 = vmatprep.subr.mxu0 0.0
    %2202 = vmatpush1.msra.mxu0 0.0
    %2203 = vmatprep.subr.mxu0 0.0
    %2204 = vmatpush1.msra.mxu0 0.0
    %2205 = vmatprep.subr.mxu0 0.0
    %2206 = vmatpush1.msra.mxu0 0.0
    %2207 = vmatprep.subr.mxu0 0.0
    %2208 = vmatpush1.msra.mxu0 0.0
    %2209 = vmatprep.subr.mxu0 0.0
    %2210 = vmatpush1.msra.mxu0 0.0
    %2211 = vmatprep.subr.mxu0 0.0
    %2212 = vmatpush1.msra.mxu0 0.0
    %2213 = vmatprep.subr.mxu0 0.0
    %2214 = vmatpush1.msra.mxu0 0.0
    %2215 = vmatprep.subr.mxu0 0.0
    %2216 = vmatpush1.msra.mxu0 0.0
    %2217 = vmatprep.subr.mxu0 0.0
    %2218 = vmatpush1.msra.mxu0 0.0
    %2219 = vmatprep.subr.mxu0 0.0
    %2220 = vmatpush1.msra.mxu0 0.0
    %2221 = vmatprep.mubr.f32.mxu0 0.0
    %2222 = vmatmul.mubr.f32.gmra.mrb[0].mxu0 %v2025
    %v2223 = vpop.f32.mrb[0].mxu0
    %v2224 = vadd.f32 0.0, %v2223
    %v2225 = vpop.f32.mrb[0].mxu0
    %v2226 = vadd.f32 0.0, %v2225
    %2227 = vmatprep.mubr.f32.mxu0 0.0
    %2228 = vmatmul.mubr.f32.gmra.mrb[0].mxu0 %v2026
    %v2229 = vpop.f32.mrb[0].mxu0
    %v2230 = vadd.f32 0.0, %v2229
    %v2231 = vpop.f32.mrb[0].mxu0
    %v2232 = vadd.f32 0.0, %v2231
    %2233 = vdwg.mxu0
    %2234 = vmatprep.subr.mxu0 %v2032
    %2235 = vmatpush1.msra.mxu0 %v2031
    %2236 = vmatprep.subr.mxu0 %v2036
    %2237 = vmatpush1.msra.mxu0 %v2035
    %2238 = vmatprep.subr.mxu0 %v2040
    %2239 = vmatpush1.msra.mxu0 %v2039
    %2240 = vmatprep.subr.mxu0 %v2044
    %2241 = vmatpush1.msra.mxu0 %v2043
    %2242 = vmatprep.subr.mxu0 %v2048
    %2243 = vmatpush1.msra.mxu0 %v2047
    %2244 = vmatprep.subr.mxu0 %v2052
    %2245 = vmatpush1.msra.mxu0 %v2051
    %2246 = vmatprep.subr.mxu0 %v2056
    %2247 = vmatpush1.msra.mxu0 %v2055
    %2248 = vmatprep.subr.mxu0 %v2060
    %2249 = vmatpush1.msra.mxu0 %v2059
    %2250 = vmatprep.subr.mxu0 %v2064
    %2251 = vmatpush1.msra.mxu0 %v2063
    %2252 = vmatprep.subr.mxu0 %v2068
    %2253 = vmatpush1.msra.mxu0 %v2067
    %2254 = vmatprep.subr.mxu0 %v2072
    %2255 = vmatpush1.msra.mxu0 %v2071
    %2256 = vmatprep.subr.mxu0 %v2076
    %2257 = vmatpush1.msra.mxu0 %v2075
    %2258 = vmatprep.subr.mxu0 %v2080
    %2259 = vmatpush1.msra.mxu0 %v2079
    %2260 = vmatprep.subr.mxu0 %v2084
    %2261 = vmatpush1.msra.mxu0 %v2083
    %2262 = vmatprep.subr.mxu0 %v2088
    %2263 = vmatpush1.msra.mxu0 %v2087
    %2264 = vmatprep.subr.mxu0 %v2092
    %2265 = vmatpush1.msra.mxu0 %v2091
    %2266 = vmatprep.subr.mxu0 0.0
    %2267 = vmatpush1.msra.mxu0 0.0
    %2268 = vmatprep.subr.mxu0 0.0
    %2269 = vmatpush1.msra.mxu0 0.0
    %2270 = vmatprep.subr.mxu0 0.0
    %2271 = vmatpush1.msra.mxu0 0.0
    %2272 = vmatprep.subr.mxu0 0.0
    %2273 = vmatpush1.msra.mxu0 0.0
    %2274 = vmatprep.subr.mxu0 0.0
    %2275 = vmatpush1.msra.mxu0 0.0
    %2276 = vmatprep.subr.mxu0 0.0
    %2277 = vmatpush1.msra.mxu0 0.0
    %2278 = vmatprep.subr.mxu0 0.0
    %2279 = vmatpush1.msra.mxu0 0.0
    %2280 = vmatprep.subr.mxu0 0.0
    %2281 = vmatpush1.msra.mxu0 0.0
    %2282 = vmatprep.subr.mxu0 0.0
    %2283 = vmatpush1.msra.mxu0 0.0
    %2284 = vmatprep.subr.mxu0 0.0
    %2285 = vmatpush1.msra.mxu0 0.0
    %2286 = vmatprep.subr.mxu0 0.0
    %2287 = vmatpush1.msra.mxu0 0.0
    %2288 = vmatprep.subr.mxu0 0.0
    %2289 = vmatpush1.msra.mxu0 0.0
    %2290 = vmatprep.subr.mxu0 0.0
    %2291 = vmatpush1.msra.mxu0 0.0
    %2292 = vmatprep.subr.mxu0 0.0
    %2293 = vmatpush1.msra.mxu0 0.0
    %2294 = vmatprep.subr.mxu0 0.0
    %2295 = vmatpush1.msra.mxu0 0.0
    %2296 = vmatprep.subr.mxu0 0.0
    %2297 = vmatpush1.msra.mxu0 0.0
    %2298 = vmatprep.mubr.f32.mxu0 0.0
    %2299 = vmatmul.mubr.f32.gmra.mrb[0].mxu0 %v2025
    %v2300 = vpop.f32.mrb[0].mxu0
    %v2301 = vadd.f32 0.0, %v2300
    %v2302 = vpop.f32.mrb[0].mxu0
    %v2303 = vadd.f32 0.0, %v2302
    %2304 = vmatprep.mubr.f32.mxu0 0.0
    %2305 = vmatmul.mubr.f32.gmra.mrb[0].mxu0 %v2026
    %v2306 = vpop.f32.mrb[0].mxu0
    %v2307 = vadd.f32 0.0, %v2306
    %v2308 = vpop.f32.mrb[0].mxu0
    %v2309 = vadd.f32 0.0, %v2308
    %2310 = vdwg.mxu0
    %2311 = vmatprep.subr.mxu0 %v2094
    %2312 = vmatpush1.msra.mxu0 %v2093
    %2313 = vmatprep.subr.mxu0 %v2098
    %2314 = vmatpush1.msra.mxu0 %v2097
    %2315 = vmatprep.subr.mxu0 %v2102
    %2316 = vmatpush1.msra.mxu0 %v2101
    %2317 = vmatprep.subr.mxu0 %v2106
    %2318 = vmatpush1.msra.mxu0 %v2105
    %2319 = vmatprep.subr.mxu0 %v2110
    %2320 = vmatpush1.msra.mxu0 %v2109
    %2321 = vmatprep.subr.mxu0 %v2114
    %2322 = vmatpush1.msra.mxu0 %v2113
    %2323 = vmatprep.subr.mxu0 %v2118
    %2324 = vmatpush1.msra.mxu0 %v2117
    %2325 = vmatprep.subr.mxu0 %v2122
    %2326 = vmatpush1.msra.mxu0 %v2121
    %2327 = vmatprep.subr.mxu0 %v2126
    %2328 = vmatpush1.msra.mxu0 %v2125
    %2329 = vmatprep.subr.mxu0 %v2130
    %2330 = vmatpush1.msra.mxu0 %v2129
    %2331 = vmatprep.subr.mxu0 %v2134
    %2332 = vmatpush1.msra.mxu0 %v2133
    %2333 = vmatprep.subr.mxu0 %v2138
    %2334 = vmatpush1.msra.mxu0 %v2137
    %2335 = vmatprep.subr.mxu0 %v2142
    %2336 = vmatpush1.msra.mxu0 %v2141
    %2337 = vmatprep.subr.mxu0 %v2146
    %2338 = vmatpush1.msra.mxu0 %v2145
    %2339 = vmatprep.subr.mxu0 %v2150
    %2340 = vmatpush1.msra.mxu0 %v2149
    %2341 = vmatprep.subr.mxu0 %v2154
    %2342 = vmatpush1.msra.mxu0 %v2153
    %2343 = vmatprep.subr.mxu0 0.0
    %2344 = vmatpush1.msra.mxu0 0.0
    %2345 = vmatprep.subr.mxu0 0.0
    %2346 = vmatpush1.msra.mxu0 0.0
    %2347 = vmatprep.subr.mxu0 0.0
    %2348 = vmatpush1.msra.mxu0 0.0
    %2349 = vmatprep.subr.mxu0 0.0
    %2350 = vmatpush1.msra.mxu0 0.0
    %2351 = vmatprep.subr.mxu0 0.0
    %2352 = vmatpush1.msra.mxu0 0.0
    %2353 = vmatprep.subr.mxu0 0.0
    %2354 = vmatpush1.msra.mxu0 0.0
    %2355 = vmatprep.subr.mxu0 0.0
    %2356 = vmatpush1.msra.mxu0 0.0
    %2357 = vmatprep.subr.mxu0 0.0
    %2358 = vmatpush1.msra.mxu0 0.0
    %2359 = vmatprep.subr.mxu0 0.0
    %2360 = vmatpush1.msra.mxu0 0.0
    %2361 = vmatprep.subr.mxu0 0.0
    %2362 = vmatpush1.msra.mxu0 0.0
    %2363 = vmatprep.subr.mxu0 0.0
    %2364 = vmatpush1.msra.mxu0 0.0
    %2365 = vmatprep.subr.mxu0 0.0
    %2366 = vmatpush1.msra.mxu0 0.0
    %2367 = vmatprep.subr.mxu0 0.0
    %2368 = vmatpush1.msra.mxu0 0.0
    %2369 = vmatprep.subr.mxu0 0.0
    %2370 = vmatpush1.msra.mxu0 0.0
    %2371 = vmatprep.subr.mxu0 0.0
    %2372 = vmatpush1.msra.mxu0 0.0
    %2373 = vmatprep.subr.mxu0 0.0
    %2374 = vmatpush1.msra.mxu0 0.0
    %2375 = vmatprep.mubr.f32.mxu0 0.0
    %2376 = vmatmul.mubr.f32.gmra.mrb[0].mxu0 %v2027
    %v2377 = vpop.f32.mrb[0].mxu0
    %v2378 = vadd.f32 0.0, %v2377
    %v2379 = vpop.f32.mrb[0].mxu0
    %v2380 = vadd.f32 0.0, %v2379
    %2381 = vmatprep.mubr.f32.mxu0 0.0
    %2382 = vmatmul.mubr.f32.gmra.mrb[0].mxu0 %v2028
    %v2383 = vpop.f32.mrb[0].mxu0
    %v2384 = vadd.f32 0.0, %v2383
    %v2385 = vpop.f32.mrb[0].mxu0
    %v2386 = vadd.f32 0.0, %v2385
    %2387 = vdwg.mxu0
    %2388 = vmatprep.subr.mxu0 %v2096
    %2389 = vmatpush1.msra.mxu0 %v2095
    %2390 = vmatprep.subr.mxu0 %v2100
    %2391 = vmatpush1.msra.mxu0 %v2099
    %2392 = vmatprep.subr.mxu0 %v2104
    %2393 = vmatpush1.msra.mxu0 %v2103
    %2394 = vmatprep.subr.mxu0 %v2108
    %2395 = vmatpush1.msra.mxu0 %v2107
    %2396 = vmatprep.subr.mxu0 %v2112
    %2397 = vmatpush1.msra.mxu0 %v2111
    %2398 = vmatprep.subr.mxu0 %v2116
    %2399 = vmatpush1.msra.mxu0 %v2115
    %2400 = vmatprep.subr.mxu0 %v2120
    %2401 = vmatpush1.msra.mxu0 %v2119
    %2402 = vmatprep.subr.mxu0 %v2124
    %2403 = vmatpush1.msra.mxu0 %v2123
    %2404 = vmatprep.subr.mxu0 %v2128
    %2405 = vmatpush1.msra.mxu0 %v2127
    %2406 = vmatprep.subr.mxu0 %v2132
    %2407 = vmatpush1.msra.mxu0 %v2131
    %2408 = vmatprep.subr.mxu0 %v2136
    %2409 = vmatpush1.msra.mxu0 %v2135
    %2410 = vmatprep.subr.mxu0 %v2140
    %2411 = vmatpush1.msra.mxu0 %v2139
    %2412 = vmatprep.subr.mxu0 %v2144
    %2413 = vmatpush1.msra.mxu0 %v2143
    %2414 = vmatprep.subr.mxu0 %v2148
    %2415 = vmatpush1.msra.mxu0 %v2147
    %2416 = vmatprep.subr.mxu0 %v2152
    %2417 = vmatpush1.msra.mxu0 %v2151
    %2418 = vmatprep.subr.mxu0 %v2156
    %2419 = vmatpush1.msra.mxu0 %v2155
    %2420 = vmatprep.subr.mxu0 0.0
    %2421 = vmatpush1.msra.mxu0 0.0
    %2422 = vmatprep.subr.mxu0 0.0
    %2423 = vmatpush1.msra.mxu0 0.0
    %2424 = vmatprep.subr.mxu0 0.0
    %2425 = vmatpush1.msra.mxu0 0.0
    %2426 = vmatprep.subr.mxu0 0.0
    %2427 = vmatpush1.msra.mxu0 0.0
    %2428 = vmatprep.subr.mxu0 0.0
    %2429 = vmatpush1.msra.mxu0 0.0
    %2430 = vmatprep.subr.mxu0 0.0
    %2431 = vmatpush1.msra.mxu0 0.0
    %2432 = vmatprep.subr.mxu0 0.0
    %2433 = vmatpush1.msra.mxu0 0.0
    %2434 = vmatprep.subr.mxu0 0.0
    %2435 = vmatpush1.msra.mxu0 0.0
    %2436 = vmatprep.subr.mxu0 0.0
    %2437 = vmatpush1.msra.mxu0 0.0
    %2438 = vmatprep.subr.mxu0 0.0
    %2439 = vmatpush1.msra.mxu0 0.0
    %2440 = vmatprep.subr.mxu0 0.0
    %2441 = vmatpush1.msra.mxu0 0.0
    %2442 = vmatprep.subr.mxu0 0.0
    %2443 = vmatpush1.msra.mxu0 0.0
    %2444 = vmatprep.subr.mxu0 0.0
    %2445 = vmatpush1.msra.mxu0 0.0
    %2446 = vmatprep.subr.mxu0 0.0
    %2447 = vmatpush1.msra.mxu0 0.0
    %2448 = vmatprep.subr.mxu0 0.0
    %2449 = vmatpush1.msra.mxu0 0.0
    %2450 = vmatprep.subr.mxu0 0.0
    %2451 = vmatpush1.msra.mxu0 0.0
    %2452 = vmatprep.mubr.f32.mxu0 0.0
    %2453 = vmatmul.mubr.f32.gmra.mrb[0].mxu0 %v2027
    %v2454 = vpop.f32.mrb[0].mxu0
    %v2455 = vadd.f32 0.0, %v2454
    %v2456 = vpop.f32.mrb[0].mxu0
    %v2457 = vadd.f32 0.0, %v2456
    %2458 = vmatprep.mubr.f32.mxu0 0.0
    %2459 = vmatmul.mubr.f32.gmra.mrb[0].mxu0 %v2028
    %v2460 = vpop.f32.mrb[0].mxu0
    %v2461 = vadd.f32 0.0, %v2460
    %v2462 = vpop.f32.mrb[0].mxu0
    %v2463 = vadd.f32 0.0, %v2462
    %2464 = vdwg.mxu0
    %v2465 = vadd.f32 %v2224, %v2378
    %v2466 = vadd.f32 %v2226, %v2380
    %v2467 = vadd.f32 %v2301, %v2455
    %v2468 = vadd.f32 %v2303, %v2457
    %v2469 = vadd.f32 %v2230, %v2384
    %v2470 = vadd.f32 %v2232, %v2386
    %v2471 = vadd.f32 %v2307, %v2461
    %v2472 = vadd.f32 %v2309, %v2463
    %v2473 = vld [vmem:[#allocation20] sm:$0xf]
    %v2475 = vlaneseq
    %v2476 = vshrl.u32 %v2475, 7
    %v2477 = vsub.s32 0, %v2476
    %v2478 = vrot.slane %v2473, %v2477
    %v2479 = vlaneseq
    %v2480 = vshrl.u32 %v2479, 7
    %v2481 = vsub.s32 1, %v2480
    %v2482 = vrot.slane %v2473, %v2481
    %v2483 = vlaneseq
    %v2484 = vshrl.u32 %v2483, 7
    %v2485 = vsub.s32 2, %v2484
    %v2486 = vrot.slane %v2473, %v2485
    %v2487 = vlaneseq
    %v2488 = vshrl.u32 %v2487, 7
    %v2489 = vsub.s32 3, %v2488
    %v2490 = vrot.slane %v2473, %v2489
    %v2495 = vmul.f32 %v2465, %v2478
    %v2496 = vmul.f32 %v2466, %v2482
    %v2497 = vmul.f32 %v2467, %v2486
    %v2498 = vmul.f32 %v2468, %v2490
    %v2499 = vmul.f32 %v2469, %v2478
    %v2500 = vmul.f32 %v2470, %v2482
    %v2501 = vmul.f32 %v2471, %v2486
    %v2502 = vmul.f32 %v2472, %v2490
    %v2503 = vld [vmem:[#allocation22] sm:$0xf]
    %v2505 = vlaneseq
    %v2506 = vshrl.u32 %v2505, 7
    %v2507 = vsub.s32 0, %v2506
    %v2508 = vrot.slane %v2503, %v2507
    %v2509 = vlaneseq
    %v2510 = vshrl.u32 %v2509, 7
    %v2511 = vsub.s32 1, %v2510
    %v2512 = vrot.slane %v2503, %v2511
    %v2513 = vlaneseq
    %v2514 = vshrl.u32 %v2513, 7
    %v2515 = vsub.s32 2, %v2514
    %v2516 = vrot.slane %v2503, %v2515
    %v2517 = vlaneseq
    %v2518 = vshrl.u32 %v2517, 7
    %v2519 = vsub.s32 3, %v2518
    %v2520 = vrot.slane %v2503, %v2519
    %v2525 = vadd.f32 %v2495, %v2508
    %v2526 = vadd.f32 %v2496, %v2512
    %v2527 = vadd.f32 %v2497, %v2516
    %v2528 = vadd.f32 %v2498, %v2520
    %v2529 = vadd.f32 %v2499, %v2508
    %v2530 = vadd.f32 %v2500, %v2512
    %v2531 = vadd.f32 %v2501, %v2516
    %v2532 = vadd.f32 %v2502, %v2520
    %v2533 = vmax.f32 %v2525, 0.0
    %v2534 = vmax.f32 %v2526, 0.0
    %v2535 = vmax.f32 %v2527, 0.0
    %v2536 = vmax.f32 %v2528, 0.0
    %v2537 = vmax.f32 %v2529, 0.0
    %v2538 = vmax.f32 %v2530, 0.0
    %v2539 = vmax.f32 %v2531, 0.0
    %v2540 = vmax.f32 %v2532, 0.0
    %v2541 = vld [vmem:[#allocation23] sm:$0xff]
    %v2542 = vld [vmem:[#allocation23 + $0x8] sm:$0xff]
    %v2543 = vld [vmem:[#allocation23 + $0x10] sm:$0xff]
    %v2544 = vld [vmem:[#allocation23 + $0x18] sm:$0xff]
    %v2545 = vld [vmem:[#allocation23 + $0x20] sm:$0xff]
    %v2546 = vld [vmem:[#allocation23 + $0x28] sm:$0xff]
    %v2547 = vld [vmem:[#allocation23 + $0x30] sm:$0xff]
    %v2548 = vld [vmem:[#allocation23 + $0x38] sm:$0xff]
    %v2549 = vld [vmem:[#allocation23 + $0x40] sm:$0xff]
    %v2550 = vld [vmem:[#allocation23 + $0x48] sm:$0xff]
    %v2551 = vld [vmem:[#allocation23 + $0x50] sm:$0xff]
    %v2552 = vld [vmem:[#allocation23 + $0x58] sm:$0xff]
    %v2553 = vld [vmem:[#allocation23 + $0x60] sm:$0xff]
    %v2554 = vld [vmem:[#allocation23 + $0x68] sm:$0xff]
    %v2555 = vld [vmem:[#allocation23 + $0x70] sm:$0xff]
    %v2556 = vld [vmem:[#allocation23 + $0x78] sm:$0xff]
    %v2557 = vld [vmem:[#allocation23 + $0x80] sm:$0xff]
    %v2558 = vld [vmem:[#allocation23 + $0x88] sm:$0xff]
    %v2559 = vld [vmem:[#allocation23 + $0x90] sm:$0xff]
    %v2560 = vld [vmem:[#allocation23 + $0x98] sm:$0xff]
    %v2561 = vld [vmem:[#allocation23 + $0xa0] sm:$0xff]
    %v2562 = vld [vmem:[#allocation23 + $0xa8] sm:$0xff]
    %v2563 = vld [vmem:[#allocation23 + $0xb0] sm:$0xff]
    %v2564 = vld [vmem:[#allocation23 + $0xb8] sm:$0xff]
    %v2565 = vld [vmem:[#allocation23 + $0xc0] sm:$0xff]
    %v2566 = vld [vmem:[#allocation23 + $0xc8] sm:$0xff]
    %v2567 = vld [vmem:[#allocation23 + $0xd0] sm:$0xff]
    %v2568 = vld [vmem:[#allocation23 + $0xd8] sm:$0xff]
    %v2569 = vld [vmem:[#allocation23 + $0xe0] sm:$0xff]
    %v2570 = vld [vmem:[#allocation23 + $0xe8] sm:$0xff]
    %v2571 = vld [vmem:[#allocation23 + $0xf0] sm:$0xff]
    %v2572 = vld [vmem:[#allocation23 + $0xf8] sm:$0xff]
    %v2573 = vld [vmem:[#allocation23 + $0x100] sm:$0xff]
    %v2574 = vld [vmem:[#allocation23 + $0x108] sm:$0xff]
    %v2575 = vld [vmem:[#allocation23 + $0x110] sm:$0xff]
    %v2576 = vld [vmem:[#allocation23 + $0x118] sm:$0xff]
    %v2577 = vld [vmem:[#allocation23 + $0x120] sm:$0xff]
    %v2578 = vld [vmem:[#allocation23 + $0x128] sm:$0xff]
    %v2579 = vld [vmem:[#allocation23 + $0x130] sm:$0xff]
    %v2580 = vld [vmem:[#allocation23 + $0x138] sm:$0xff]
    %v2581 = vld [vmem:[#allocation23 + $0x140] sm:$0xff]
    %v2582 = vld [vmem:[#allocation23 + $0x148] sm:$0xff]
    %v2583 = vld [vmem:[#allocation23 + $0x150] sm:$0xff]
    %v2584 = vld [vmem:[#allocation23 + $0x158] sm:$0xff]
    %v2585 = vld [vmem:[#allocation23 + $0x160] sm:$0xff]
    %v2586 = vld [vmem:[#allocation23 + $0x168] sm:$0xff]
    %v2587 = vld [vmem:[#allocation23 + $0x170] sm:$0xff]
    %v2588 = vld [vmem:[#allocation23 + $0x178] sm:$0xff]
    %v2589 = vld [vmem:[#allocation23 + $0x180] sm:$0xff]
    %v2590 = vld [vmem:[#allocation23 + $0x188] sm:$0xff]
    %v2591 = vld [vmem:[#allocation23 + $0x190] sm:$0xff]
    %v2592 = vld [vmem:[#allocation23 + $0x198] sm:$0xff]
    %v2593 = vld [vmem:[#allocation23 + $0x1a0] sm:$0xff]
    %v2594 = vld [vmem:[#allocation23 + $0x1a8] sm:$0xff]
    %v2595 = vld [vmem:[#allocation23 + $0x1b0] sm:$0xff]
    %v2596 = vld [vmem:[#allocation23 + $0x1b8] sm:$0xff]
    %v2597 = vld [vmem:[#allocation23 + $0x1c0] sm:$0xff]
    %v2598 = vld [vmem:[#allocation23 + $0x1c8] sm:$0xff]
    %v2599 = vld [vmem:[#allocation23 + $0x1d0] sm:$0xff]
    %v2600 = vld [vmem:[#allocation23 + $0x1d8] sm:$0xff]
    %v2601 = vld [vmem:[#allocation23 + $0x1e0] sm:$0xff]
    %v2602 = vld [vmem:[#allocation23 + $0x1e8] sm:$0xff]
    %v2603 = vld [vmem:[#allocation23 + $0x1f0] sm:$0xff]
    %v2604 = vld [vmem:[#allocation23 + $0x1f8] sm:$0xff]
    %2605 = vmatprep.subr.mxu0 0.0
    %2606 = vmatpush1.msra.mxu0 %v2541
    %2607 = vmatprep.subr.mxu0 0.0
    %2608 = vmatpush1.msra.mxu0 %v2542
    %2609 = vmatprep.subr.mxu0 0.0
    %2610 = vmatpush1.msra.mxu0 %v2543
    %2611 = vmatprep.subr.mxu0 0.0
    %2612 = vmatpush1.msra.mxu0 %v2544
    %2613 = vmatprep.subr.mxu0 0.0
    %2614 = vmatpush1.msra.mxu0 %v2545
    %2615 = vmatprep.subr.mxu0 0.0
    %2616 = vmatpush1.msra.mxu0 %v2546
    %2617 = vmatprep.subr.mxu0 0.0
    %2618 = vmatpush1.msra.mxu0 %v2547
    %2619 = vmatprep.subr.mxu0 0.0
    %2620 = vmatpush1.msra.mxu0 %v2548
    %2621 = vmatprep.subr.mxu0 0.0
    %2622 = vmatpush1.msra.mxu0 %v2549
    %2623 = vmatprep.subr.mxu0 0.0
    %2624 = vmatpush1.msra.mxu0 %v2550
    %2625 = vmatprep.subr.mxu0 0.0
    %2626 = vmatpush1.msra.mxu0 %v2551
    %2627 = vmatprep.subr.mxu0 0.0
    %2628 = vmatpush1.msra.mxu0 %v2552
    %2629 = vmatprep.subr.mxu0 0.0
    %2630 = vmatpush1.msra.mxu0 %v2553
    %2631 = vmatprep.subr.mxu0 0.0
    %2632 = vmatpush1.msra.mxu0 %v2554
    %2633 = vmatprep.subr.mxu0 0.0
    %2634 = vmatpush1.msra.mxu0 %v2555
    %2635 = vmatprep.subr.mxu0 0.0
    %2636 = vmatpush1.msra.mxu0 %v2556
    %2637 = vmatprep.subr.mxu0 0.0
    %2638 = vmatpush1.msra.mxu0 %v2557
    %2639 = vmatprep.subr.mxu0 0.0
    %2640 = vmatpush1.msra.mxu0 %v2558
    %2641 = vmatprep.subr.mxu0 0.0
    %2642 = vmatpush1.msra.mxu0 %v2559
    %2643 = vmatprep.subr.mxu0 0.0
    %2644 = vmatpush1.msra.mxu0 %v2560
    %2645 = vmatprep.subr.mxu0 0.0
    %2646 = vmatpush1.msra.mxu0 %v2561
    %2647 = vmatprep.subr.mxu0 0.0
    %2648 = vmatpush1.msra.mxu0 %v2562
    %2649 = vmatprep.subr.mxu0 0.0
    %2650 = vmatpush1.msra.mxu0 %v2563
    %2651 = vmatprep.subr.mxu0 0.0
    %2652 = vmatpush1.msra.mxu0 %v2564
    %2653 = vmatprep.subr.mxu0 0.0
    %2654 = vmatpush1.msra.mxu0 %v2565
    %2655 = vmatprep.subr.mxu0 0.0
    %2656 = vmatpush1.msra.mxu0 %v2566
    %2657 = vmatprep.subr.mxu0 0.0
    %2658 = vmatpush1.msra.mxu0 %v2567
    %2659 = vmatprep.subr.mxu0 0.0
    %2660 = vmatpush1.msra.mxu0 %v2568
    %2661 = vmatprep.subr.mxu0 0.0
    %2662 = vmatpush1.msra.mxu0 %v2569
    %2663 = vmatprep.subr.mxu0 0.0
    %2664 = vmatpush1.msra.mxu0 %v2570
    %2665 = vmatprep.subr.mxu0 0.0
    %2666 = vmatpush1.msra.mxu0 %v2571
    %2667 = vmatprep.subr.mxu0 0.0
    %2668 = vmatpush1.msra.mxu0 %v2572
    %2669 = vmatprep.mubr.f32.mxu0 %v2534
    %2670 = vmatmul.mubr.f32.gmra.mrb[0].mxu0 %v2533
    %v2671 = vpop.f32.mrb[0].mxu0
    %v2672 = vadd.f32 0.0, %v2671
    %v2673 = vpop.f32.mrb[0].mxu0
    %2674 = vmatprep.mubr.f32.mxu0 %v2538
    %2675 = vmatmul.mubr.f32.gmra.mrb[0].mxu0 %v2537
    %v2676 = vpop.f32.mrb[0].mxu0
    %v2677 = vadd.f32 0.0, %v2676
    %v2678 = vpop.f32.mrb[0].mxu0
    %2679 = vdwg.mxu0
    %2680 = vmatprep.subr.mxu0 0.0
    %2681 = vmatpush1.msra.mxu0 %v2573
    %2682 = vmatprep.subr.mxu0 0.0
    %2683 = vmatpush1.msra.mxu0 %v2574
    %2684 = vmatprep.subr.mxu0 0.0
    %2685 = vmatpush1.msra.mxu0 %v2575
    %2686 = vmatprep.subr.mxu0 0.0
    %2687 = vmatpush1.msra.mxu0 %v2576
    %2688 = vmatprep.subr.mxu0 0.0
    %2689 = vmatpush1.msra.mxu0 %v2577
    %2690 = vmatprep.subr.mxu0 0.0
    %2691 = vmatpush1.msra.mxu0 %v2578
    %2692 = vmatprep.subr.mxu0 0.0
    %2693 = vmatpush1.msra.mxu0 %v2579
    %2694 = vmatprep.subr.mxu0 0.0
    %2695 = vmatpush1.msra.mxu0 %v2580
    %2696 = vmatprep.subr.mxu0 0.0
    %2697 = vmatpush1.msra.mxu0 %v2581
    %2698 = vmatprep.subr.mxu0 0.0
    %2699 = vmatpush1.msra.mxu0 %v2582
    %2700 = vmatprep.subr.mxu0 0.0
    %2701 = vmatpush1.msra.mxu0 %v2583
    %2702 = vmatprep.subr.mxu0 0.0
    %2703 = vmatpush1.msra.mxu0 %v2584
    %2704 = vmatprep.subr.mxu0 0.0
    %2705 = vmatpush1.msra.mxu0 %v2585
    %2706 = vmatprep.subr.mxu0 0.0
    %2707 = vmatpush1.msra.mxu0 %v2586
    %2708 = vmatprep.subr.mxu0 0.0
    %2709 = vmatpush1.msra.mxu0 %v2587
    %2710 = vmatprep.subr.mxu0 0.0
    %2711 = vmatpush1.msra.mxu0 %v2588
    %2712 = vmatprep.subr.mxu0 0.0
    %2713 = vmatpush1.msra.mxu0 %v2589
    %2714 = vmatprep.subr.mxu0 0.0
    %2715 = vmatpush1.msra.mxu0 %v2590
    %2716 = vmatprep.subr.mxu0 0.0
    %2717 = vmatpush1.msra.mxu0 %v2591
    %2718 = vmatprep.subr.mxu0 0.0
    %2719 = vmatpush1.msra.mxu0 %v2592
    %2720 = vmatprep.subr.mxu0 0.0
    %2721 = vmatpush1.msra.mxu0 %v2593
    %2722 = vmatprep.subr.mxu0 0.0
    %2723 = vmatpush1.msra.mxu0 %v2594
    %2724 = vmatprep.subr.mxu0 0.0
    %2725 = vmatpush1.msra.mxu0 %v2595
    %2726 = vmatprep.subr.mxu0 0.0
    %2727 = vmatpush1.msra.mxu0 %v2596
    %2728 = vmatprep.subr.mxu0 0.0
    %2729 = vmatpush1.msra.mxu0 %v2597
    %2730 = vmatprep.subr.mxu0 0.0
    %2731 = vmatpush1.msra.mxu0 %v2598
    %2732 = vmatprep.subr.mxu0 0.0
    %2733 = vmatpush1.msra.mxu0 %v2599
    %2734 = vmatprep.subr.mxu0 0.0
    %2735 = vmatpush1.msra.mxu0 %v2600
    %2736 = vmatprep.subr.mxu0 0.0
    %2737 = vmatpush1.msra.mxu0 %v2601
    %2738 = vmatprep.subr.mxu0 0.0
    %2739 = vmatpush1.msra.mxu0 %v2602
    %2740 = vmatprep.subr.mxu0 0.0
    %2741 = vmatpush1.msra.mxu0 %v2603
    %2742 = vmatprep.subr.mxu0 0.0
    %2743 = vmatpush1.msra.mxu0 %v2604
    %2744 = vmatprep.mubr.f32.mxu0 %v2536
    %2745 = vmatmul.mubr.f32.gmra.mrb[0].mxu0 %v2535
    %v2746 = vpop.f32.mrb[0].mxu0
    %v2747 = vadd.f32 %v2672, %v2746
    %v2748 = vpop.f32.mrb[0].mxu0
    %2749 = vmatprep.mubr.f32.mxu0 %v2540
    %2750 = vmatmul.mubr.f32.gmra.mrb[0].mxu0 %v2539
    %v2751 = vpop.f32.mrb[0].mxu0
    %v2752 = vadd.f32 %v2677, %v2751
    %v2753 = vpop.f32.mrb[0].mxu0
    %2754 = vdwg.mxu0
    %v2755 = vld [vmem:[#allocation25] sm:$0x1]
    %v2757 = vlaneseq
    %v2758 = vshrl.u32 %v2757, 7
    %v2759 = vsub.s32 0, %v2758
    %v2760 = vrot.slane %v2755, %v2759
    %v2762 = vmul.f32 %v2747, %v2760
    %v2763 = vmul.f32 %v2752, %v2760
    %v2764 = vld [vmem:[#allocation26] sm:$0x1]
    %v2766 = vlaneseq
    %v2767 = vshrl.u32 %v2766, 7
    %v2768 = vsub.s32 0, %v2767
    %v2769 = vrot.slane %v2764, %v2768
    %v2771 = vadd.f32 %v2762, %v2769
    %v2772 = vadd.f32 %v2763, %v2769
    %v2773 = vmax.f32 %v2771, 0.0
    %v2774 = vmax.f32 %v2772, 0.0
    %2775 = vst.msk [vmem:[#allocation28] sm:$0xff] %vm1364, %v2773
    %2776 = vst.msk [vmem:[#allocation28 + $0x8] sm:$0xff] %vm1364, %v2774
    // Predicated region
    $region130: #{tpu_custom_call.1} parent=1 // pred_check
      _
    $region131: #{tpu_custom_call.1} parent=1 // pred_check_branch
      %2778 = sbr.rel (0) target = $region133
    $region132: #{tpu_custom_call.1} parent=1 // pred_region
      %s2780 = ssub.s32 256, 256
      %2781 = vsyncadd [#allocation4], %s2780
      %s2782 = sshll.u32 [#allocation28], 4
      %s2783 = int_to_ptr.vmem [resolvable:$true] %s2782
      %2788 = dma.vmem_to_hbm [thread:$0]  %s2783, 256, %s16, [#allocation4], 128, 128, 8
    $region133: #{tpu_custom_call.1} parent=1 // pred_fallthru
      _
    // Predicated region
    $region134: #{tpu_custom_call.1} parent=1 // pred_check
      _
    $region135: #{tpu_custom_call.1} parent=1 // pred_check_branch
      %2790 = sbr.rel (0) target = $region137
    $region136: #{tpu_custom_call.1} parent=1 // pred_region
      %2791 = dma.done [#allocation4], 256
    $region137: #{tpu_custom_call.1} parent=1 // pred_fallthru
      _
    %2792 = vsyncpa [#allocation3], 1
    %2793 = vsyncpa [#allocation6], 1
    %2794 = vsyncpa [#allocation9], 1
    %2795 = vsyncpa [#allocation12], 1
    %2796 = vsyncpa [#allocation15], 1
    %2797 = vsyncpa [#allocation18], 1
    %2798 = vsyncpa [#allocation21], 1
    %2799 = vsyncpa [#allocation24], 1
    %2800 = vsyncpa [#allocation27], 1
    %2801 = vsyncpa [#allocation4], 1

</llo_original>
